<compile_context>
chip_gen: v7x
topology: tpu7x:2x2x1
jax: 0.10.0
libtpu: 0.0.40
codegen_flags: <defaults>
</compile_context>

<pallas_src>
import functools

import jax
import jax.numpy as jnp
from jax.experimental import pallas as pl
from jax.experimental.pallas import tpu as pltpu

VMEM = pl.BlockSpec(memory_space=pltpu.MemorySpace.VMEM)


# ----------------------------------------------------------------------------
# Fused Pallas kernel: whole MGADN forward in one call
# ----------------------------------------------------------------------------
def _mgadn_fused_kernel(x_ref, a_norm_ref, deg_ref, xw_ref, w_ref, b_ref, o_ref,
                        *, h_feats):
    H = h_feats
    f32 = jnp.float32
    bf16 = jnp.bfloat16

    def wblk(g, c):
        # (H, H) weight tile: row-group g, lane-column c of the packed slab.
        return w_ref[g * H:(g + 1) * H, c * H:(c + 1) * H]

    def bias(i, width=None):
        width = H if width is None else width
        return b_ref[i:i + 1, 0:width]              # (1, width), broadcasts over rows

    def mm(a, w):
        return jnp.dot(a.astype(bf16), w, preferred_element_type=f32)

    x = x_ref[...]
    a_norm = a_norm_ref[...]
    deg = deg_ref[...]
    a_bf = a_norm.astype(bf16)

    # One MXU pass for every weight that consumes x (lane-packed on the host):
    #   lanes [0,H)   -> decoder layer-0          lanes [2H,3H) -> EdgeConv theta
    #   lanes [H,2H)  -> GraphConv-1 (x @ W1)     lanes [3H,4H) -> EdgeConv shift
    xr = jnp.dot(x.astype(bf16), xw_ref[...], preferred_element_type=f32)   # (N, 128)

    # ---- out1 = Decoder(x, graph) ------------------------------------------
    # TODO(synk): original `Decoder` source was not provided; deterministic
    # MLP stand-in (4 Linear layers, ReLU between) with matching shapes.
    h = jnp.maximum(xr[:, 0:H] + bias(0), 0.0)
    h = jnp.maximum(mm(h, wblk(0, 0)) + bias(1), 0.0)
    h = jnp.maximum(mm(h, wblk(0, 1)) + bias(2), 0.0)
    out1 = mm(h, wblk(0, 2)) + bias(3)

    # ---- out2 = GCN branch: 2x GraphConv relu(A_norm (xW) + b) + 2-layer MLP
    h = xr[:, H:2 * H]                                                       # x @ gcn_w1
    h = jnp.maximum(jnp.dot(a_bf, h.astype(bf16), preferred_element_type=f32)
                    + bias(4), 0.0)
    h = mm(h, wblk(0, 3))                                                    # h @ gcn_w2
    h = jnp.maximum(jnp.dot(a_bf, h.astype(bf16), preferred_element_type=f32)
                    + bias(5), 0.0)
    h = jnp.maximum(mm(h, wblk(1, 0)) + bias(6), 0.0)                        # GCN-MLP 1
    out2 = mm(h, wblk(1, 1)) + bias(7)                                       # GCN-MLP 2

    # ---- F = EdgeConv(graph, x):
    #   h_i = max_{j in N(i)} theta(x_j - x_i) + phi(x_i)
    #       = max_j (x_j Wt) + x_i (Wp - Wt) + (bt + bp)
    theta = xr[:, 2 * H:3 * H]
    shift = xr[:, 3 * H:4 * H]
    neg = jnp.float32(-1e30)
    # a_norm's nonzero pattern equals adj's for deg>0 nodes (host-guarded), so
    # adj never needs to enter the kernel.
    # TODO(synk): for large N, tile this masked max over j-blocks with a
    # running-max accumulator instead of the (N, N, H) broadcast (mandatory
    # first on v7x's smaller VMEM).
    masked = jnp.where(a_norm[:, :, None] > 0, theta[None, :, :], neg)
    mx = jnp.max(masked, axis=1)
    f_feat = jnp.where(deg > 0, mx + shift + bias(8), 0.0)

    # ---- fusion head (concat-free lin1, gate mix, tanh head, padded output)
    output = mm(out1, wblk(1, 2)) + mm(out2, wblk(1, 3)) + bias(9)
    gate = jax.nn.sigmoid(mm(output, wblk(2, 0)) + bias(10))
    out = gate * output + (1.0 - gate) * f_feat
    h = jnp.tanh(mm(out, wblk(2, 1)) + bias(11))
    o_ref[...] = mm(h, w_ref[3 * H:4 * H, :]) + bias(12, 128)


def mgadn_forward(p, x, a_norm, deg):
    n, in_feats = x.shape
    H = p["xw"].shape[1] // 4

    flops = (2 * n * in_feats * 4 * H        # packed x-consumer matmul
             + 10 * 2 * n * H * H            # ten (H,H) matmuls
             + 2 * 2 * n * n * H             # two A_norm @ h matmuls
             + 2 * n * H * 128)              # lane-padded final head
    bytes_accessed = (x.size * 4 + a_norm.size * 4 + deg.size * 4
                      + p["xw"].size * 2 + p["w"].size * 2 + p["b"].size * 4
                      + n * 128 * 4)
    cost = pl.CostEstimate(flops=flops,
                           transcendentals=3 * n * H,     # sigmoid + tanh
                           bytes_accessed=bytes_accessed)

    out_pad = pl.pallas_call(
        functools.partial(_mgadn_fused_kernel, h_feats=H),
        out_shape=jax.ShapeDtypeStruct((n, 128), jnp.float32),
        in_specs=[VMEM] * 6,
        out_specs=VMEM,
        cost_estimate=cost,
    )(x, a_norm, deg, p["xw"], p["w"], p["b"])
    # lane-dense padded slab -> the real (N, 2) logits
    return out_pad[:, :2]


# ----------------------------------------------------------------------------
# Parameter init (deterministic, PyTorch Linear-style uniform) + host packing
# ----------------------------------------------------------------------------
def init_linear(key, fan_in, fan_out):
    k1, k2 = jax.random.split(key)
    bound = 1.0 / jnp.sqrt(jnp.float32(fan_in))
    w = jax.random.uniform(k1, (fan_in, fan_out), jnp.float32, -bound, bound)
    b = jax.random.uniform(k2, (1, fan_out), jnp.float32, -bound, bound)
    return w, b


def init_params(key, in_feats, h_feats, n_layers):
    H = h_feats
    # The packed-slab layout below is written for the test configuration:
    # 4 decoder layers, H = 32 (4*H = 128-lane pack, full v5e MXU width;
    # TODO(synk): pack to 256 lanes on v6e/v7x if more shared-input weights appear).
    assert n_layers == 4 and 4 * H == 128

    keys = jax.random.split(key, 32)
    ki = iter(keys)

    # Decoder stand-in: n_layers Linear layers (in->h, h->h, ...), ReLU between.
    # TODO(synk): original Decoder source not provided.
    dims = [in_feats] + [H] * n_layers
    dec = [init_linear(next(ki), dims[i], dims[i + 1]) for i in range(n_layers)]

    # GCN "filters3": 2 GraphConv layers + 2-layer MLP
    gcn_w1, gcn_b1 = init_linear(next(ki), in_feats, H)
    gcn_w2, gcn_b2 = init_linear(next(ki), H, H)
    gcn_m1w, gcn_m1b = init_linear(next(ki), H, H)
    gcn_m2w, gcn_m2b = init_linear(next(ki), H, H)

    # EdgeConv theta / phi
    wt, bt = init_linear(next(ki), in_feats, H)
    wp, bp = init_linear(next(ki), in_feats, H)

    lin1_w, lin1_b = init_linear(next(ki), 2 * H, H)
    gate_w, gate_b = init_linear(next(ki), H, H)
    head1_w, head1_b = init_linear(next(ki), H, H)
    head2_w, head2_b = init_linear(next(ki), H, 2)

    # ---- x-consumer weight slab (in_feats, 4H): [dec0 | gcn_w1 | Wt | Wp - Wt]
    xw = jnp.concatenate([dec[0][0], gcn_w1, wt, wp - wt], axis=1)

    # ---- main weight slab (4H, 4H): 4 row-groups x 4 lane-columns of (H, H)
    zeros_h = jnp.zeros((H, H), jnp.float32)
    g0 = jnp.concatenate([dec[1][0], dec[2][0], dec[3][0], gcn_w2], axis=1)
    g1 = jnp.concatenate([gcn_m1w, gcn_m2w, lin1_w[:H], lin1_w[H:]], axis=1)
    g2 = jnp.concatenate([gate_w, head1_w, zeros_h, zeros_h], axis=1)
    g3 = jnp.pad(head2_w, ((0, 0), (0, 4 * H - 2)))          # lane-padded final head
    w = jnp.concatenate([g0, g1, g2, g3], axis=0)

    # ---- bias slab (16, 128): one bias per row, lanes [0,H) (head2 row is full 128)
    def row(b, width=H):
        return jnp.pad(b.reshape(1, -1), ((0, 0), (0, 128 - width)))

    bias_rows = [
        row(dec[0][1]), row(dec[1][1]), row(dec[2][1]), row(dec[3][1]),   # 0..3
        row(gcn_b1), row(gcn_b2), row(gcn_m1b), row(gcn_m2b),             # 4..7
        row(bt + bp),                                                     # 8
        row(lin1_b), row(gate_b), row(head1_b),                           # 9..11
        row(head2_b, 2),                                                  # 12
    ]
    bias_rows += [jnp.zeros((1, 128), jnp.float32)] * (16 - len(bias_rows))
    b = jnp.concatenate(bias_rows, axis=0)

    return {
        "xw": xw.astype(jnp.bfloat16),   # bf16 MXU operands, f32 accumulation
        "w": w.astype(jnp.bfloat16),
        "b": b,                          # biases stay f32 (added post-accumulate)
    }


# ----------------------------------------------------------------------------
# Main
# ----------------------------------------------------------------------------
if __name__ == "__main__":
    N_NODES, IN_FEATS, H_FEATS, N_LAYERS = 32, 16, 32, 4

    key = jax.random.PRNGKey(0)
    kx, ka, kp = jax.random.split(key, 3)

    # node features
    x = jax.random.normal(kx, (N_NODES, IN_FEATS), jnp.float32)

    # random symmetric adjacency, no self loops, degree >= 2 (ring added)
    rand = (jax.random.uniform(ka, (N_NODES, N_NODES)) < 0.2).astype(jnp.float32)
    adj = jnp.maximum(rand, rand.T) * (1.0 - jnp.eye(N_NODES, dtype=jnp.float32))
    ring = jnp.roll(jnp.eye(N_NODES, dtype=jnp.float32), 1, axis=1)
    adj = jnp.maximum(adj, jnp.maximum(ring, ring.T))

    # GraphConv 'both' normalization D^-1/2 A D^-1/2 and node degree (host glue),
    # now with a deg==0 guard so isolated nodes can't produce NaNs.
    deg = jnp.sum(adj, axis=1, keepdims=True)                       # (N, 1)
    dinv = jnp.where(deg[:, 0] > 0,
                     1.0 / jnp.sqrt(jnp.maximum(deg[:, 0], 1.0)), 0.0)
    a_norm = adj * dinv[:, None] * dinv[None, :]

    params = init_params(kp, IN_FEATS, H_FEATS, N_LAYERS)

    fwd = jax.jit(mgadn_forward)
    result = fwd(params, x, a_norm, deg)
    jax.block_until_ready(result)

    assert result.shape == (N_NODES, 2)
    assert result.dtype == jnp.float32
    print("KERNEL_OK")
</pallas_src>

<mosaic_0001>
module attributes {stable_mosaic.version = 11 : i64} {
  func.func @_mgadn_fused_kernel(%arg0: memref<32x16xf32, #tpu.memory_space<vmem>>, %arg1: memref<32x32xf32, #tpu.memory_space<vmem>>, %arg2: memref<32x1xf32, #tpu.memory_space<vmem>>, %arg3: memref<16x128xbf16, #tpu.memory_space<vmem>>, %arg4: memref<128x128xbf16, #tpu.memory_space<vmem>>, %arg5: memref<16x128xf32, #tpu.memory_space<vmem>>, %arg6: memref<32x128xf32, #tpu.memory_space<vmem>>) attributes {dimension_semantics = [], scalar_prefetch = 0 : i64, scratch_operands = 0 : i64, tpu.core_type = #tpu.core_type<tc>} {
    %c0 = arith.constant 0 : index
    %c0_0 = arith.constant 0 : index
    %0 = vector.load %arg0[%c0, %c0_0] : memref<32x16xf32, #tpu.memory_space<vmem>>, vector<32x16xf32>
    %c0_1 = arith.constant 0 : index
    %c0_2 = arith.constant 0 : index
    %1 = vector.load %arg1[%c0_1, %c0_2] : memref<32x32xf32, #tpu.memory_space<vmem>>, vector<32x32xf32>
    %c0_3 = arith.constant 0 : index
    %c0_4 = arith.constant 0 : index
    %2 = vector.load %arg2[%c0_3, %c0_4] : memref<32x1xf32, #tpu.memory_space<vmem>>, vector<32x1xf32>
    %3 = arith.truncf %1 : vector<32x32xf32> to vector<32x32xbf16>
    %4 = arith.truncf %0 : vector<32x16xf32> to vector<32x16xbf16>
    %c0_5 = arith.constant 0 : index
    %c0_6 = arith.constant 0 : index
    %5 = vector.load %arg3[%c0_5, %c0_6] : memref<16x128xbf16, #tpu.memory_space<vmem>>, vector<16x128xbf16>
    %cst = arith.constant dense<0.000000e+00> : vector<32x128xf32>
    %6 = tpu.matmul %4, %5, %cst {dimension_numbers = #tpu.dot_dimension_numbers<[1], [0], [0], [1], [0, 0, 1, 1], [], []>} : vector<32x16xbf16>, vector<16x128xbf16>, vector<32x128xf32> -> vector<32x128xf32>
    %7 = vector.extract_strided_slice %6 {offsets = [0, 0], sizes = [32, 32], strides = [1, 1]} : vector<32x128xf32> to vector<32x32xf32>
    %c0_7 = arith.constant 0 : index
    %c0_8 = arith.constant 0 : index
    %8 = vector.load %arg5[%c0_7, %c0_8] : memref<16x128xf32, #tpu.memory_space<vmem>>, vector<1x32xf32>
    %9 = vector.broadcast %8 : vector<1x32xf32> to vector<32x32xf32>
    %10 = arith.addf %7, %9 : vector<32x32xf32>
    %cst_9 = arith.constant 0.000000e+00 : f32
    %11 = vector.broadcast %cst_9 : f32 to vector<32x32xf32>
    %12 = arith.maximumf %10, %11 : vector<32x32xf32>
    %c0_10 = arith.constant 0 : index
    %c0_11 = arith.constant 0 : index
    %13 = vector.load %arg4[%c0_10, %c0_11] : memref<128x128xbf16, #tpu.memory_space<vmem>>, vector<32x32xbf16>
    %14 = arith.truncf %12 : vector<32x32xf32> to vector<32x32xbf16>
    %cst_12 = arith.constant dense<0.000000e+00> : vector<32x32xf32>
    %15 = tpu.matmul %14, %13, %cst_12 {dimension_numbers = #tpu.dot_dimension_numbers<[1], [0], [0], [1], [0, 0, 1, 1], [], []>} : vector<32x32xbf16>, vector<32x32xbf16>, vector<32x32xf32> -> vector<32x32xf32>
    %c1 = arith.constant 1 : index
    %c0_13 = arith.constant 0 : index
    %16 = vector.load %arg5[%c1, %c0_13] : memref<16x128xf32, #tpu.memory_space<vmem>>, vector<1x32xf32>
    %17 = vector.broadcast %16 : vector<1x32xf32> to vector<32x32xf32>
    %18 = arith.addf %15, %17 : vector<32x32xf32>
    %cst_14 = arith.constant 0.000000e+00 : f32
    %19 = vector.broadcast %cst_14 : f32 to vector<32x32xf32>
    %20 = arith.maximumf %18, %19 : vector<32x32xf32>
    %c0_15 = arith.constant 0 : index
    %c32 = arith.constant 32 : index
    %21 = vector.load %arg4[%c0_15, %c32] : memref<128x128xbf16, #tpu.memory_space<vmem>>, vector<32x32xbf16>
    %22 = arith.truncf %20 : vector<32x32xf32> to vector<32x32xbf16>
    %cst_16 = arith.constant dense<0.000000e+00> : vector<32x32xf32>
    %23 = tpu.matmul %22, %21, %cst_16 {dimension_numbers = #tpu.dot_dimension_numbers<[1], [0], [0], [1], [0, 0, 1, 1], [], []>} : vector<32x32xbf16>, vector<32x32xbf16>, vector<32x32xf32> -> vector<32x32xf32>
    %c2 = arith.constant 2 : index
    %c0_17 = arith.constant 0 : index
    %24 = vector.load %arg5[%c2, %c0_17] : memref<16x128xf32, #tpu.memory_space<vmem>>, vector<1x32xf32>
    %25 = vector.broadcast %24 : vector<1x32xf32> to vector<32x32xf32>
    %26 = arith.addf %23, %25 : vector<32x32xf32>
    %cst_18 = arith.constant 0.000000e+00 : f32
    %27 = vector.broadcast %cst_18 : f32 to vector<32x32xf32>
    %28 = arith.maximumf %26, %27 : vector<32x32xf32>
    %c0_19 = arith.constant 0 : index
    %c64 = arith.constant 64 : index
    %29 = vector.load %arg4[%c0_19, %c64] : memref<128x128xbf16, #tpu.memory_space<vmem>>, vector<32x32xbf16>
    %30 = arith.truncf %28 : vector<32x32xf32> to vector<32x32xbf16>
    %cst_20 = arith.constant dense<0.000000e+00> : vector<32x32xf32>
    %31 = tpu.matmul %30, %29, %cst_20 {dimension_numbers = #tpu.dot_dimension_numbers<[1], [0], [0], [1], [0, 0, 1, 1], [], []>} : vector<32x32xbf16>, vector<32x32xbf16>, vector<32x32xf32> -> vector<32x32xf32>
    %c3 = arith.constant 3 : index
    %c0_21 = arith.constant 0 : index
    %32 = vector.load %arg5[%c3, %c0_21] : memref<16x128xf32, #tpu.memory_space<vmem>>, vector<1x32xf32>
    %33 = vector.broadcast %32 : vector<1x32xf32> to vector<32x32xf32>
    %34 = arith.addf %31, %33 : vector<32x32xf32>
    %35 = vector.extract_strided_slice %6 {offsets = [0, 32], sizes = [32, 32], strides = [1, 1]} : vector<32x128xf32> to vector<32x32xf32>
    %36 = arith.truncf %35 : vector<32x32xf32> to vector<32x32xbf16>
    %cst_22 = arith.constant dense<0.000000e+00> : vector<32x32xf32>
    %37 = tpu.matmul %3, %36, %cst_22 {dimension_numbers = #tpu.dot_dimension_numbers<[1], [0], [0], [1], [0, 0, 1, 1], [], []>} : vector<32x32xbf16>, vector<32x32xbf16>, vector<32x32xf32> -> vector<32x32xf32>
    %c4 = arith.constant 4 : index
    %c0_23 = arith.constant 0 : index
    %38 = vector.load %arg5[%c4, %c0_23] : memref<16x128xf32, #tpu.memory_space<vmem>>, vector<1x32xf32>
    %39 = vector.broadcast %38 : vector<1x32xf32> to vector<32x32xf32>
    %40 = arith.addf %37, %39 : vector<32x32xf32>
    %cst_24 = arith.constant 0.000000e+00 : f32
    %41 = vector.broadcast %cst_24 : f32 to vector<32x32xf32>
    %42 = arith.maximumf %40, %41 : vector<32x32xf32>
    %c0_25 = arith.constant 0 : index
    %c96 = arith.constant 96 : index
    %43 = vector.load %arg4[%c0_25, %c96] : memref<128x128xbf16, #tpu.memory_space<vmem>>, vector<32x32xbf16>
    %44 = arith.truncf %42 : vector<32x32xf32> to vector<32x32xbf16>
    %cst_26 = arith.constant dense<0.000000e+00> : vector<32x32xf32>
    %45 = tpu.matmul %44, %43, %cst_26 {dimension_numbers = #tpu.dot_dimension_numbers<[1], [0], [0], [1], [0, 0, 1, 1], [], []>} : vector<32x32xbf16>, vector<32x32xbf16>, vector<32x32xf32> -> vector<32x32xf32>
    %46 = arith.truncf %45 : vector<32x32xf32> to vector<32x32xbf16>
    %cst_27 = arith.constant dense<0.000000e+00> : vector<32x32xf32>
    %47 = tpu.matmul %3, %46, %cst_27 {dimension_numbers = #tpu.dot_dimension_numbers<[1], [0], [0], [1], [0, 0, 1, 1], [], []>} : vector<32x32xbf16>, vector<32x32xbf16>, vector<32x32xf32> -> vector<32x32xf32>
    %c5 = arith.constant 5 : index
    %c0_28 = arith.constant 0 : index
    %48 = vector.load %arg5[%c5, %c0_28] : memref<16x128xf32, #tpu.memory_space<vmem>>, vector<1x32xf32>
    %49 = vector.broadcast %48 : vector<1x32xf32> to vector<32x32xf32>
    %50 = arith.addf %47, %49 : vector<32x32xf32>
    %cst_29 = arith.constant 0.000000e+00 : f32
    %51 = vector.broadcast %cst_29 : f32 to vector<32x32xf32>
    %52 = arith.maximumf %50, %51 : vector<32x32xf32>
    %c32_30 = arith.constant 32 : index
    %c0_31 = arith.constant 0 : index
    %53 = vector.load %arg4[%c32_30, %c0_31] : memref<128x128xbf16, #tpu.memory_space<vmem>>, vector<32x32xbf16>
    %54 = arith.truncf %52 : vector<32x32xf32> to vector<32x32xbf16>
    %cst_32 = arith.constant dense<0.000000e+00> : vector<32x32xf32>
    %55 = tpu.matmul %54, %53, %cst_32 {dimension_numbers = #tpu.dot_dimension_numbers<[1], [0], [0], [1], [0, 0, 1, 1], [], []>} : vector<32x32xbf16>, vector<32x32xbf16>, vector<32x32xf32> -> vector<32x32xf32>
    %c6 = arith.constant 6 : index
    %c0_33 = arith.constant 0 : index
    %56 = vector.load %arg5[%c6, %c0_33] : memref<16x128xf32, #tpu.memory_space<vmem>>, vector<1x32xf32>
    %57 = vector.broadcast %56 : vector<1x32xf32> to vector<32x32xf32>
    %58 = arith.addf %55, %57 : vector<32x32xf32>
    %cst_34 = arith.constant 0.000000e+00 : f32
    %59 = vector.broadcast %cst_34 : f32 to vector<32x32xf32>
    %60 = arith.maximumf %58, %59 : vector<32x32xf32>
    %c32_35 = arith.constant 32 : index
    %c32_36 = arith.constant 32 : index
    %61 = vector.load %arg4[%c32_35, %c32_36] : memref<128x128xbf16, #tpu.memory_space<vmem>>, vector<32x32xbf16>
    %62 = arith.truncf %60 : vector<32x32xf32> to vector<32x32xbf16>
    %cst_37 = arith.constant dense<0.000000e+00> : vector<32x32xf32>
    %63 = tpu.matmul %62, %61, %cst_37 {dimension_numbers = #tpu.dot_dimension_numbers<[1], [0], [0], [1], [0, 0, 1, 1], [], []>} : vector<32x32xbf16>, vector<32x32xbf16>, vector<32x32xf32> -> vector<32x32xf32>
    %c7 = arith.constant 7 : index
    %c0_38 = arith.constant 0 : index
    %64 = vector.load %arg5[%c7, %c0_38] : memref<16x128xf32, #tpu.memory_space<vmem>>, vector<1x32xf32>
    %65 = vector.broadcast %64 : vector<1x32xf32> to vector<32x32xf32>
    %66 = arith.addf %63, %65 : vector<32x32xf32>
    %67 = vector.extract_strided_slice %6 {offsets = [0, 64], sizes = [32, 32], strides = [1, 1]} : vector<32x128xf32> to vector<32x32xf32>
    %68 = vector.extract_strided_slice %6 {offsets = [0, 96], sizes = [32, 32], strides = [1, 1]} : vector<32x128xf32> to vector<32x32xf32>
    %69 = vector.shape_cast %1 : vector<32x32xf32> to vector<32x32x1xf32>
    %cst_39 = arith.constant 0.000000e+00 : f32
    %70 = vector.broadcast %cst_39 : f32 to vector<32x32x1xf32>
    %71 = arith.cmpf ogt, %69, %70 : vector<32x32x1xf32>
    %72 = vector.shape_cast %67 : vector<32x32xf32> to vector<1x32x32xf32>
    %cst_40 = arith.constant -1.000000e+30 : f32
    %73 = vector.shape_cast %71 : vector<32x32x1xi1> to vector<32x32x1xi1>
    %74 = vector.broadcast %73 : vector<32x32x1xi1> to vector<32x32x32xi1>
    %75 = vector.shape_cast %72 : vector<1x32x32xf32> to vector<1x32x32xf32>
    %76 = vector.broadcast %75 : vector<1x32x32xf32> to vector<32x32x32xf32>
    %77 = vector.broadcast %cst_40 : f32 to vector<32x32x32xf32>
    %78 = arith.select %74, %76, %77 : vector<32x32x32xi1>, vector<32x32x32xf32>
    %cst_41 = arith.constant dense<0xFF800000> : vector<32x32xf32>
    %79 = vector.multi_reduction <maximumf>, %78, %cst_41 [1] : vector<32x32x32xf32> to vector<32x32xf32>
    %cst_42 = arith.constant 0.000000e+00 : f32
    %80 = vector.broadcast %cst_42 : f32 to vector<32x1xf32>
    %81 = arith.cmpf ogt, %2, %80 : vector<32x1xf32>
    %82 = arith.addf %79, %68 : vector<32x32xf32>
    %c8 = arith.constant 8 : index
    %c0_43 = arith.constant 0 : index
    %83 = vector.load %arg5[%c8, %c0_43] : memref<16x128xf32, #tpu.memory_space<vmem>>, vector<1x32xf32>
    %84 = vector.broadcast %83 : vector<1x32xf32> to vector<32x32xf32>
    %85 = arith.addf %82, %84 : vector<32x32xf32>
    %cst_44 = arith.constant 0.000000e+00 : f32
    %86 = vector.shape_cast %81 : vector<32x1xi1> to vector<32x1xi1>
    %87 = vector.broadcast %86 : vector<32x1xi1> to vector<32x32xi1>
    %88 = vector.broadcast %cst_44 : f32 to vector<32x32xf32>
    %89 = arith.select %87, %85, %88 : vector<32x32xi1>, vector<32x32xf32>
    %c32_45 = arith.constant 32 : index
    %c64_46 = arith.constant 64 : index
    %90 = vector.load %arg4[%c32_45, %c64_46] : memref<128x128xbf16, #tpu.memory_space<vmem>>, vector<32x32xbf16>
    %91 = arith.truncf %34 : vector<32x32xf32> to vector<32x32xbf16>
    %cst_47 = arith.constant dense<0.000000e+00> : vector<32x32xf32>
    %92 = tpu.matmul %91, %90, %cst_47 {dimension_numbers = #tpu.dot_dimension_numbers<[1], [0], [0], [1], [0, 0, 1, 1], [], []>} : vector<32x32xbf16>, vector<32x32xbf16>, vector<32x32xf32> -> vector<32x32xf32>
    %c32_48 = arith.constant 32 : index
    %c96_49 = arith.constant 96 : index
    %93 = vector.load %arg4[%c32_48, %c96_49] : memref<128x128xbf16, #tpu.memory_space<vmem>>, vector<32x32xbf16>
    %94 = arith.truncf %66 : vector<32x32xf32> to vector<32x32xbf16>
    %cst_50 = arith.constant dense<0.000000e+00> : vector<32x32xf32>
    %95 = tpu.matmul %94, %93, %cst_50 {dimension_numbers = #tpu.dot_dimension_numbers<[1], [0], [0], [1], [0, 0, 1, 1], [], []>} : vector<32x32xbf16>, vector<32x32xbf16>, vector<32x32xf32> -> vector<32x32xf32>
    %96 = arith.addf %92, %95 : vector<32x32xf32>
    %c9 = arith.constant 9 : index
    %c0_51 = arith.constant 0 : index
    %97 = vector.load %arg5[%c9, %c0_51] : memref<16x128xf32, #tpu.memory_space<vmem>>, vector<1x32xf32>
    %98 = vector.broadcast %97 : vector<1x32xf32> to vector<32x32xf32>
    %99 = arith.addf %96, %98 : vector<32x32xf32>
    %c64_52 = arith.constant 64 : index
    %c0_53 = arith.constant 0 : index
    %100 = vector.load %arg4[%c64_52, %c0_53] : memref<128x128xbf16, #tpu.memory_space<vmem>>, vector<32x32xbf16>
    %101 = arith.truncf %99 : vector<32x32xf32> to vector<32x32xbf16>
    %cst_54 = arith.constant dense<0.000000e+00> : vector<32x32xf32>
    %102 = tpu.matmul %101, %100, %cst_54 {dimension_numbers = #tpu.dot_dimension_numbers<[1], [0], [0], [1], [0, 0, 1, 1], [], []>} : vector<32x32xbf16>, vector<32x32xbf16>, vector<32x32xf32> -> vector<32x32xf32>
    %c10 = arith.constant 10 : index
    %c0_55 = arith.constant 0 : index
    %103 = vector.load %arg5[%c10, %c0_55] : memref<16x128xf32, #tpu.memory_space<vmem>>, vector<1x32xf32>
    %104 = vector.broadcast %103 : vector<1x32xf32> to vector<32x32xf32>
    %105 = arith.addf %102, %104 : vector<32x32xf32>
    %106 = arith.negf %105 : vector<32x32xf32>
    %107 = math.exp %106 : vector<32x32xf32>
    %cst_56 = arith.constant 1.000000e+00 : f32
    %108 = vector.broadcast %cst_56 : f32 to vector<32x32xf32>
    %109 = arith.addf %108, %107 : vector<32x32xf32>
    %110 = arith.divf %108, %109 : vector<32x32xf32>
    %111 = arith.mulf %110, %99 : vector<32x32xf32>
    %cst_57 = arith.constant 1.000000e+00 : f32
    %112 = vector.broadcast %cst_57 : f32 to vector<32x32xf32>
    %113 = arith.subf %112, %110 : vector<32x32xf32>
    %114 = arith.mulf %113, %89 : vector<32x32xf32>
    %115 = arith.addf %111, %114 : vector<32x32xf32>
    %c64_58 = arith.constant 64 : index
    %c32_59 = arith.constant 32 : index
    %116 = vector.load %arg4[%c64_58, %c32_59] : memref<128x128xbf16, #tpu.memory_space<vmem>>, vector<32x32xbf16>
    %117 = arith.truncf %115 : vector<32x32xf32> to vector<32x32xbf16>
    %cst_60 = arith.constant dense<0.000000e+00> : vector<32x32xf32>
    %118 = tpu.matmul %117, %116, %cst_60 {dimension_numbers = #tpu.dot_dimension_numbers<[1], [0], [0], [1], [0, 0, 1, 1], [], []>} : vector<32x32xbf16>, vector<32x32xbf16>, vector<32x32xf32> -> vector<32x32xf32>
    %c11 = arith.constant 11 : index
    %c0_61 = arith.constant 0 : index
    %119 = vector.load %arg5[%c11, %c0_61] : memref<16x128xf32, #tpu.memory_space<vmem>>, vector<1x32xf32>
    %120 = vector.broadcast %119 : vector<1x32xf32> to vector<32x32xf32>
    %121 = arith.addf %118, %120 : vector<32x32xf32>
    %122 = math.tanh %121 : vector<32x32xf32>
    %c96_62 = arith.constant 96 : index
    %c0_63 = arith.constant 0 : index
    %123 = vector.load %arg4[%c96_62, %c0_63] : memref<128x128xbf16, #tpu.memory_space<vmem>>, vector<32x128xbf16>
    %124 = arith.truncf %122 : vector<32x32xf32> to vector<32x32xbf16>
    %cst_64 = arith.constant dense<0.000000e+00> : vector<32x128xf32>
    %125 = tpu.matmul %124, %123, %cst_64 {dimension_numbers = #tpu.dot_dimension_numbers<[1], [0], [0], [1], [0, 0, 1, 1], [], []>} : vector<32x32xbf16>, vector<32x128xbf16>, vector<32x128xf32> -> vector<32x128xf32>
    %c12 = arith.constant 12 : index
    %c0_65 = arith.constant 0 : index
    %126 = vector.load %arg5[%c12, %c0_65] : memref<16x128xf32, #tpu.memory_space<vmem>>, vector<1x128xf32>
    %127 = vector.broadcast %126 : vector<1x128xf32> to vector<32x128xf32>
    %128 = arith.addf %125, %127 : vector<32x128xf32>
    %c0_66 = arith.constant 0 : index
    %c0_67 = arith.constant 0 : index
    %129 = vector.load %arg6[%c0_66, %c0_67] : memref<32x128xf32, #tpu.memory_space<vmem>>, vector<32x128xf32>
    tpu.vector_store %arg6[%c0_66, %c0_67], %128 {strides = array<i32>} : memref<32x128xf32, #tpu.memory_space<vmem>>, vector<32x128xf32>,
    return
  }
}

</mosaic_0001>

<llo_original>
// kernel: mgadn_forward.1
$region0: #{mgadn_forward.1}
  #allocation0 [shape = 'u32[]', space=smem, size = 0x4, offset = 0x4, fixed_abs, tag = 'smem constant byte address 0x4 - core index']
  #allocation1 [shape = 'u32[144,128]{1,0:T(1,128)}', space=vmem, size = 0x12000, scoped, tag = 'internal scratch']
  %s0 = inlined_call_operand.vmem [shape: f32[32,16], index: 0, kind: input, shape index: {}]
  %s1 = inlined_call_operand.vmem [shape: f32[32,32], index: 1, kind: input, shape index: {}]
  %s2 = inlined_call_operand.vmem [shape: f32[32,1], index: 2, kind: input, shape index: {}]
  %s3 = inlined_call_operand.hbm [shape: bf16[16,128], index: 3, kind: input, shape index: {}]
  %s4 = inlined_call_operand.vmem [shape: bf16[128,128], index: 4, kind: input, shape index: {}]
  %s5 = inlined_call_operand.hbm [shape: f32[16,128], index: 5, kind: input, shape index: {}]
  %s6 = inlined_call_operand.vmem [shape: f32[32,128], index: 6, kind: output, shape index: {}]
  %s7 = sld [smem:[#allocation0]]
  $region42: #{mgadn_forward.1} parent=0
    _
  %s9 = ssub.s32 1, %s7
  %s10 = scalar_select 0, %s9, %s7
  $region1: #{mgadn_forward.1} parent=0
    #allocation2 [shape = 'u8[4096]{0}', space=vmem, size = 0x1000, scoped, tag = 'input window, operand 3, single buffered']
    #allocation3 [shape = 's32[1]{0}', space=sflag, size = 0x4, scoped, tag = 'scoped memory for mgadn_forward.1']
    #allocation4 [shape = 'u8[8192]{0}', space=vmem, size = 0x2000, scoped, tag = 'input window, operand 5, single buffered']
    #allocation5 [shape = 's32[1]{0}', space=sflag, size = 0x4, scoped, tag = 'scoped memory for mgadn_forward.1']
    %11 = vsyncpa [#allocation3], 0
    %12 = vsyncpa [#allocation5], 0
    // Predicated region
    $region2: #{mgadn_forward.1} parent=1 // pred_check
      _
    $region3: #{mgadn_forward.1} parent=1 // pred_check_branch
      %14 = sbr.rel (0) target = $region5
    $region4: #{mgadn_forward.1} parent=1 // pred_region
      _
    $region5: #{mgadn_forward.1} parent=1 // pred_fallthru
      _
    // Predicated region
    $region6: #{mgadn_forward.1} parent=1 // pred_check
      _
    $region7: #{mgadn_forward.1} parent=1 // pred_check_branch
      %16 = sbr.rel (0) target = $region9
    $region8: #{mgadn_forward.1} parent=1 // pred_region
      _
    $region9: #{mgadn_forward.1} parent=1 // pred_fallthru
      _
    // Predicated region
    $region10: #{mgadn_forward.1} parent=1 // pred_check
      _
    $region11: #{mgadn_forward.1} parent=1 // pred_check_branch
      %18 = sbr.rel (0) target = $region13
    $region12: #{mgadn_forward.1} parent=1 // pred_region
      _
    $region13: #{mgadn_forward.1} parent=1 // pred_fallthru
      _
    // Predicated region
    $region14: #{mgadn_forward.1} parent=1 // pred_check
      _
    $region15: #{mgadn_forward.1} parent=1 // pred_check_branch
      %20 = sbr.rel (0) target = $region17
    $region16: #{mgadn_forward.1} parent=1 // pred_region
      %s22 = ssub.s32 128, 128
      %23 = vsyncadd [#allocation3], %s22
      %s24 = sshll.u32 [#allocation2], 4
      %s25 = int_to_ptr.vmem [resolvable:$true] %s24
      %30 = dma.hbm_to_vmem [thread:$0]  %s3, 128, %s25, [#allocation3], 64, 64, 4
    $region17: #{mgadn_forward.1} parent=1 // pred_fallthru
      _
    // Predicated region
    $region18: #{mgadn_forward.1} parent=1 // pred_check
      _
    $region19: #{mgadn_forward.1} parent=1 // pred_check_branch
      %32 = sbr.rel (0) target = $region21
    $region20: #{mgadn_forward.1} parent=1 // pred_region
      _
    $region21: #{mgadn_forward.1} parent=1 // pred_fallthru
      _
    // Predicated region
    $region22: #{mgadn_forward.1} parent=1 // pred_check
      _
    $region23: #{mgadn_forward.1} parent=1 // pred_check_branch
      %34 = sbr.rel (0) target = $region25
    $region24: #{mgadn_forward.1} parent=1 // pred_region
      %s36 = ssub.s32 256, 256
      %37 = vsyncadd [#allocation5], %s36
      %s38 = sshll.u32 [#allocation4], 4
      %s39 = int_to_ptr.vmem [resolvable:$true] %s38
      %44 = dma.hbm_to_vmem [thread:$0]  %s5, 256, %s39, [#allocation5], 128, 128, 8
    $region25: #{mgadn_forward.1} parent=1 // pred_fallthru
      _
    // Predicated region
    $region26: #{mgadn_forward.1} parent=1 // pred_check
      _
    $region27: #{mgadn_forward.1} parent=1 // pred_check_branch
      %46 = sbr.rel (0) target = $region29
    $region28: #{mgadn_forward.1} parent=1 // pred_region
      %47 = dma.done [#allocation3], 128
    $region29: #{mgadn_forward.1} parent=1 // pred_fallthru
      _
    // Predicated region
    $region30: #{mgadn_forward.1} parent=1 // pred_check
      _
    $region31: #{mgadn_forward.1} parent=1 // pred_check_branch
      %49 = sbr.rel (0) target = $region33
    $region32: #{mgadn_forward.1} parent=1 // pred_region
      %50 = dma.done [#allocation5], 256
    $region33: #{mgadn_forward.1} parent=1 // pred_fallthru
      _
    %v52 = vld [vmem:[%s0] sm:$0xff]
    %v53 = vld [vmem:[%s0 + $0x8] sm:$0xff]
    %v54 = vld [vmem:[%s0 + $0x10] sm:$0xff]
    %v55 = vld [vmem:[%s0 + $0x18] sm:$0xff]
    %v56 = vld [vmem:[%s1] sm:$0xff]
    %v57 = vld [vmem:[%s1 + $0x8] sm:$0xff]
    %v58 = vld [vmem:[%s1 + $0x10] sm:$0xff]
    %v59 = vld [vmem:[%s1 + $0x18] sm:$0xff]
    %v60 = vld [vmem:[%s2] sm:$0xff]
    %v61 = vld [vmem:[%s2 + $0x8] sm:$0xff]
    %v62 = vld [vmem:[%s2 + $0x10] sm:$0xff]
    %v63 = vld [vmem:[%s2 + $0x18] sm:$0xff]
    %v64 = vpack.c.bf16 %v57, %v56
    %v65 = vpack.c.bf16 %v59, %v58
    %v66 = vpack.c.bf16 %v53, %v52
    %v67 = vpack.c.bf16 %v55, %v54
    %v68 = vld [vmem:[#allocation2] sm:$0xf]
    %v69 = vld [vmem:[#allocation2 + $0x4] sm:$0xf]
    %v72 = vunpack.c.l.b16 %v68
    %v73 = vunpack.c.l.b16 %v69
    %v74 = vpack.c.b16 %v73, %v72
    %vm76 = vcmask 130048
    %v78 = vsel %vm76, %v66, 0
    %v81 = vsel %vm76, %v67, 0
    %83 = vmatprep.subr.bf16.mxu0 0
    %84 = vmatpush1.bf16.msra.mxu0 %v74
    %85 = vmatprep.subr.bf16.mxu0 0
    %86 = vmatpush1.bf16.msra.mxu0 0
    %87 = vmatprep.subr.bf16.mxu0 0
    %88 = vmatpush1.bf16.msra.mxu0 0
    %89 = vmatprep.subr.bf16.mxu0 0
    %90 = vmatpush1.bf16.msra.mxu0 0
    %91 = vmatprep.subr.bf16.mxu0 0
    %92 = vmatpush1.bf16.msra.mxu0 0
    %93 = vmatprep.subr.bf16.mxu0 0
    %94 = vmatpush1.bf16.msra.mxu0 0
    %95 = vmatprep.subr.bf16.mxu0 0
    %96 = vmatpush1.bf16.msra.mxu0 0
    %97 = vmatprep.subr.bf16.mxu0 0
    %98 = vmatpush1.bf16.msra.mxu0 0
    %99 = vmatprep.subr.bf16.mxu0 0
    %100 = vmatpush1.bf16.msra.mxu0 0
    %101 = vmatprep.subr.bf16.mxu0 0
    %102 = vmatpush1.bf16.msra.mxu0 0
    %103 = vmatprep.subr.bf16.mxu0 0
    %104 = vmatpush1.bf16.msra.mxu0 0
    %105 = vmatprep.subr.bf16.mxu0 0
    %106 = vmatpush1.bf16.msra.mxu0 0
    %107 = vmatprep.subr.bf16.mxu0 0
    %108 = vmatpush1.bf16.msra.mxu0 0
    %109 = vmatprep.subr.bf16.mxu0 0
    %110 = vmatpush1.bf16.msra.mxu0 0
    %111 = vmatprep.subr.bf16.mxu0 0
    %112 = vmatpush1.bf16.msra.mxu0 0
    %113 = vmatprep.subr.bf16.mxu0 0
    %114 = vmatpush1.bf16.msra.mxu0 0
    %115 = vmatprep.mubr.bf16.mxu0 0
    %116 = vmatmul.mubr.bf16.gmra.mrb[0].mxu0 %v78
    %v117 = vpop.f32.mrb[0].mxu0
    %v118 = vadd.f32 0.0, %v117
    %v119 = vpop.f32.mrb[0].mxu0
    %v120 = vpop.f32.mrb[0].mxu0
    %v121 = vadd.f32 0.0, %v120
    %v122 = vpop.f32.mrb[0].mxu0
    %123 = vmatprep.mubr.bf16.mxu0 0
    %124 = vmatmul.mubr.bf16.gmra.mrb[0].mxu0 %v81
    %v125 = vpop.f32.mrb[0].mxu0
    %v126 = vadd.f32 0.0, %v125
    %v127 = vpop.f32.mrb[0].mxu0
    %v128 = vpop.f32.mrb[0].mxu0
    %v129 = vadd.f32 0.0, %v128
    %v130 = vpop.f32.mrb[0].mxu0
    %131 = vdwg.mxu0
    %v132 = vld [vmem:[#allocation4] sm:$0x1]
    %v133 = vlaneseq
    %v134 = vshrl.u32 %v133, 7
    %v135 = vsub.s32 0, %v134
    %v136 = vrot.slane %v132, %v135
    %v137 = vadd.f32 %v118, %v136
    %v138 = vadd.f32 %v121, %v136
    %v139 = vadd.f32 %v126, %v136
    %v140 = vadd.f32 %v129, %v136
    %v141 = vmax.f32 %v137, 0.0
    %v142 = vmax.f32 %v138, 0.0
    %v143 = vmax.f32 %v139, 0.0
    %v144 = vmax.f32 %v140, 0.0
    %v145 = vld [vmem:[%s4] sm:$0xf]
    %v146 = vld [vmem:[%s4 + $0x4] sm:$0xf]
    %v147 = vld [vmem:[%s4 + $0x8] sm:$0xf]
    %v148 = vld [vmem:[%s4 + $0xc] sm:$0xf]
    %v149 = vpack.c.bf16 %v142, %v141
    %v150 = vpack.c.bf16 %v144, %v143
    %v151 = vld [vmem:[#allocation4 + $0x1] sm:$0x1]
    %v152 = vlaneseq
    %v153 = vshrl.u32 %v152, 7
    %v154 = vsub.s32 0, %v153
    %v155 = vrot.slane %v151, %v154
    %v160 = vunpack.c.l.b16 %v145
    %v161 = vunpack.c.l.b16 %v146
    %v162 = vunpack.c.l.b16 %v147
    %v163 = vunpack.c.l.b16 %v148
    %v164 = vpack.c.b16 %v161, %v160
    %v165 = vpack.c.b16 %v163, %v162
    %vm168 = vcmask 261120
    %v170 = vsel %vm168, %v149, 0
    %v173 = vsel %vm168, %v150, 0
    %175 = vmatprep.subr.bf16.mxu0 0
    %176 = vmatpush1.bf16.msra.mxu0 %v164
    %177 = vmatprep.subr.bf16.mxu0 0
    %178 = vmatpush1.bf16.msra.mxu0 %v165
    %179 = vmatprep.subr.bf16.mxu0 0
    %180 = vmatpush1.bf16.msra.mxu0 0
    %181 = vmatprep.subr.bf16.mxu0 0
    %182 = vmatpush1.bf16.msra.mxu0 0
    %183 = vmatprep.subr.bf16.mxu0 0
    %184 = vmatpush1.bf16.msra.mxu0 0
    %185 = vmatprep.subr.bf16.mxu0 0
    %186 = vmatpush1.bf16.msra.mxu0 0
    %187 = vmatprep.subr.bf16.mxu0 0
    %188 = vmatpush1.bf16.msra.mxu0 0
    %189 = vmatprep.subr.bf16.mxu0 0
    %190 = vmatpush1.bf16.msra.mxu0 0
    %191 = vmatprep.subr.bf16.mxu0 0
    %192 = vmatpush1.bf16.msra.mxu0 0
    %193 = vmatprep.subr.bf16.mxu0 0
    %194 = vmatpush1.bf16.msra.mxu0 0
    %195 = vmatprep.subr.bf16.mxu0 0
    %196 = vmatpush1.bf16.msra.mxu0 0
    %197 = vmatprep.subr.bf16.mxu0 0
    %198 = vmatpush1.bf16.msra.mxu0 0
    %199 = vmatprep.subr.bf16.mxu0 0
    %200 = vmatpush1.bf16.msra.mxu0 0
    %201 = vmatprep.subr.bf16.mxu0 0
    %202 = vmatpush1.bf16.msra.mxu0 0
    %203 = vmatprep.subr.bf16.mxu0 0
    %204 = vmatpush1.bf16.msra.mxu0 0
    %205 = vmatprep.subr.bf16.mxu0 0
    %206 = vmatpush1.bf16.msra.mxu0 0
    %207 = vmatprep.mubr.bf16.mxu0 0
    %208 = vmatmul.mubr.bf16.gmra.mrb[0].mxu0 %v170
    %v209 = vpop.f32.mrb[0].mxu0
    %v210 = vadd.f32 %v155, %v209
    %v211 = vpop.f32.mrb[0].mxu0
    %v212 = vpop.f32.mrb[0].mxu0
    %v213 = vadd.f32 %v155, %v212
    %v214 = vpop.f32.mrb[0].mxu0
    %215 = vmatprep.mubr.bf16.mxu0 0
    %216 = vmatmul.mubr.bf16.gmra.mrb[0].mxu0 %v173
    %v217 = vpop.f32.mrb[0].mxu0
    %v218 = vadd.f32 %v155, %v217
    %v219 = vpop.f32.mrb[0].mxu0
    %v220 = vpop.f32.mrb[0].mxu0
    %v221 = vadd.f32 %v155, %v220
    %v222 = vpop.f32.mrb[0].mxu0
    %223 = vdwg.mxu0
    %v224 = vmax.f32 %v210, 0.0
    %v225 = vmax.f32 %v213, 0.0
    %v226 = vmax.f32 %v218, 0.0
    %v227 = vmax.f32 %v221, 0.0
    %v228 = vpack.c.bf16 %v225, %v224
    %v229 = vpack.c.bf16 %v227, %v226
    %v230 = vld [vmem:[#allocation4 + $0x2] sm:$0x1]
    %v231 = vlaneseq
    %v232 = vshrl.u32 %v231, 7
    %v233 = vsub.s32 0, %v232
    %v234 = vrot.slane %v230, %v233
    %235 = vrot.lane.b32.xlu0 %v164, 96
    %v236 = vpop.permute.xlu0 %235
    %237 = vrot.lane.b32.xlu0 %v165, 96
    %v238 = vpop.permute.xlu0 %237
    %v242 = vsel %vm168, %v228, 0
    %v245 = vsel %vm168, %v229, 0
    %247 = vmatprep.subr.bf16.mxu0 0
    %248 = vmatpush1.bf16.msra.mxu0 %v236
    %249 = vmatprep.subr.bf16.mxu0 0
    %250 = vmatpush1.bf16.msra.mxu0 %v238
    %251 = vmatprep.subr.bf16.mxu0 0
    %252 = vmatpush1.bf16.msra.mxu0 0
    %253 = vmatprep.subr.bf16.mxu0 0
    %254 = vmatpush1.bf16.msra.mxu0 0
    %255 = vmatprep.subr.bf16.mxu0 0
    %256 = vmatpush1.bf16.msra.mxu0 0
    %257 = vmatprep.subr.bf16.mxu0 0
    %258 = vmatpush1.bf16.msra.mxu0 0
    %259 = vmatprep.subr.bf16.mxu0 0
    %260 = vmatpush1.bf16.msra.mxu0 0
    %261 = vmatprep.subr.bf16.mxu0 0
    %262 = vmatpush1.bf16.msra.mxu0 0
    %263 = vmatprep.subr.bf16.mxu0 0
    %264 = vmatpush1.bf16.msra.mxu0 0
    %265 = vmatprep.subr.bf16.mxu0 0
    %266 = vmatpush1.bf16.msra.mxu0 0
    %267 = vmatprep.subr.bf16.mxu0 0
    %268 = vmatpush1.bf16.msra.mxu0 0
    %269 = vmatprep.subr.bf16.mxu0 0
    %270 = vmatpush1.bf16.msra.mxu0 0
    %271 = vmatprep.subr.bf16.mxu0 0
    %272 = vmatpush1.bf16.msra.mxu0 0
    %273 = vmatprep.subr.bf16.mxu0 0
    %274 = vmatpush1.bf16.msra.mxu0 0
    %275 = vmatprep.subr.bf16.mxu0 0
    %276 = vmatpush1.bf16.msra.mxu0 0
    %277 = vmatprep.subr.bf16.mxu0 0
    %278 = vmatpush1.bf16.msra.mxu0 0
    %279 = vmatprep.mubr.bf16.mxu0 0
    %280 = vmatmul.mubr.bf16.gmra.mrb[0].mxu0 %v242
    %v281 = vpop.f32.mrb[0].mxu0
    %v282 = vadd.f32 %v234, %v281
    %v283 = vpop.f32.mrb[0].mxu0
    %v284 = vpop.f32.mrb[0].mxu0
    %v285 = vadd.f32 %v234, %v284
    %v286 = vpop.f32.mrb[0].mxu0
    %287 = vmatprep.mubr.bf16.mxu0 0
    %288 = vmatmul.mubr.bf16.gmra.mrb[0].mxu0 %v245
    %v289 = vpop.f32.mrb[0].mxu0
    %v290 = vadd.f32 %v234, %v289
    %v291 = vpop.f32.mrb[0].mxu0
    %v292 = vpop.f32.mrb[0].mxu0
    %v293 = vadd.f32 %v234, %v292
    %v294 = vpop.f32.mrb[0].mxu0
    %295 = vdwg.mxu0
    %v296 = vmax.f32 %v282, 0.0
    %v297 = vmax.f32 %v285, 0.0
    %v298 = vmax.f32 %v290, 0.0
    %v299 = vmax.f32 %v293, 0.0
    %v300 = vpack.c.bf16 %v297, %v296
    %v301 = vpack.c.bf16 %v299, %v298
    %v302 = vld [vmem:[#allocation4 + $0x3] sm:$0x1]
    %v303 = vlaneseq
    %v304 = vshrl.u32 %v303, 7
    %v305 = vsub.s32 0, %v304
    %v306 = vrot.slane %v302, %v305
    %307 = vrot.lane.b32.xlu0 %v164, 64
    %v308 = vpop.permute.xlu0 %307
    %309 = vrot.lane.b32.xlu0 %v165, 64
    %v310 = vpop.permute.xlu0 %309
    %v314 = vsel %vm168, %v300, 0
    %v317 = vsel %vm168, %v301, 0
    %319 = vmatprep.subr.bf16.mxu0 0
    %320 = vmatpush1.bf16.msra.mxu0 %v308
    %321 = vmatprep.subr.bf16.mxu0 0
    %322 = vmatpush1.bf16.msra.mxu0 %v310
    %323 = vmatprep.subr.bf16.mxu0 0
    %324 = vmatpush1.bf16.msra.mxu0 0
    %325 = vmatprep.subr.bf16.mxu0 0
    %326 = vmatpush1.bf16.msra.mxu0 0
    %327 = vmatprep.subr.bf16.mxu0 0
    %328 = vmatpush1.bf16.msra.mxu0 0
    %329 = vmatprep.subr.bf16.mxu0 0
    %330 = vmatpush1.bf16.msra.mxu0 0
    %331 = vmatprep.subr.bf16.mxu0 0
    %332 = vmatpush1.bf16.msra.mxu0 0
    %333 = vmatprep.subr.bf16.mxu0 0
    %334 = vmatpush1.bf16.msra.mxu0 0
    %335 = vmatprep.subr.bf16.mxu0 0
    %336 = vmatpush1.bf16.msra.mxu0 0
    %337 = vmatprep.subr.bf16.mxu0 0
    %338 = vmatpush1.bf16.msra.mxu0 0
    %339 = vmatprep.subr.bf16.mxu0 0
    %340 = vmatpush1.bf16.msra.mxu0 0
    %341 = vmatprep.subr.bf16.mxu0 0
    %342 = vmatpush1.bf16.msra.mxu0 0
    %343 = vmatprep.subr.bf16.mxu0 0
    %344 = vmatpush1.bf16.msra.mxu0 0
    %345 = vmatprep.subr.bf16.mxu0 0
    %346 = vmatpush1.bf16.msra.mxu0 0
    %347 = vmatprep.subr.bf16.mxu0 0
    %348 = vmatpush1.bf16.msra.mxu0 0
    %349 = vmatprep.subr.bf16.mxu0 0
    %350 = vmatpush1.bf16.msra.mxu0 0
    %351 = vmatprep.mubr.bf16.mxu0 0
    %352 = vmatmul.mubr.bf16.gmra.mrb[0].mxu0 %v314
    %v353 = vpop.f32.mrb[0].mxu0
    %v354 = vadd.f32 %v306, %v353
    %v355 = vpop.f32.mrb[0].mxu0
    %v356 = vpop.f32.mrb[0].mxu0
    %v357 = vadd.f32 %v306, %v356
    %v358 = vpop.f32.mrb[0].mxu0
    %359 = vmatprep.mubr.bf16.mxu0 0
    %360 = vmatmul.mubr.bf16.gmra.mrb[0].mxu0 %v317
    %v361 = vpop.f32.mrb[0].mxu0
    %v362 = vadd.f32 %v306, %v361
    %v363 = vpop.f32.mrb[0].mxu0
    %v364 = vpop.f32.mrb[0].mxu0
    %v365 = vadd.f32 %v306, %v364
    %v366 = vpop.f32.mrb[0].mxu0
    %367 = vdwg.mxu0
    %v368 = vpack.c.bf16 %v121, %v118
    %v369 = vpack.c.bf16 %v129, %v126
    %v370 = vld [vmem:[#allocation4 + $0x4] sm:$0x1]
    %v371 = vlaneseq
    %v372 = vshrl.u32 %v371, 7
    %v373 = vsub.s32 0, %v372
    %v374 = vrot.slane %v370, %v373
    %377 = vrot.lane.b32.xlu0 %v368, 96
    %v378 = vpop.permute.xlu0 %377
    %379 = vrot.lane.b32.xlu0 %v369, 96
    %v380 = vpop.permute.xlu0 %379
    %v384 = vsel %vm168, %v64, 0
    %v387 = vsel %vm168, %v65, 0
    %389 = vmatprep.subr.bf16.mxu0 0
    %390 = vmatpush1.bf16.msra.mxu0 %v378
    %391 = vmatprep.subr.bf16.mxu0 0
    %392 = vmatpush1.bf16.msra.mxu0 %v380
    %393 = vmatprep.subr.bf16.mxu0 0
    %394 = vmatpush1.bf16.msra.mxu0 0
    %395 = vmatprep.subr.bf16.mxu0 0
    %396 = vmatpush1.bf16.msra.mxu0 0
    %397 = vmatprep.subr.bf16.mxu0 0
    %398 = vmatpush1.bf16.msra.mxu0 0
    %399 = vmatprep.subr.bf16.mxu0 0
    %400 = vmatpush1.bf16.msra.mxu0 0
    %401 = vmatprep.subr.bf16.mxu0 0
    %402 = vmatpush1.bf16.msra.mxu0 0
    %403 = vmatprep.subr.bf16.mxu0 0
    %404 = vmatpush1.bf16.msra.mxu0 0
    %405 = vmatprep.subr.bf16.mxu0 0
    %406 = vmatpush1.bf16.msra.mxu0 0
    %407 = vmatprep.subr.bf16.mxu0 0
    %408 = vmatpush1.bf16.msra.mxu0 0
    %409 = vmatprep.subr.bf16.mxu0 0
    %410 = vmatpush1.bf16.msra.mxu0 0
    %411 = vmatprep.subr.bf16.mxu0 0
    %412 = vmatpush1.bf16.msra.mxu0 0
    %413 = vmatprep.subr.bf16.mxu0 0
    %414 = vmatpush1.bf16.msra.mxu0 0
    %415 = vmatprep.subr.bf16.mxu0 0
    %416 = vmatpush1.bf16.msra.mxu0 0
    %417 = vmatprep.subr.bf16.mxu0 0
    %418 = vmatpush1.bf16.msra.mxu0 0
    %419 = vmatprep.subr.bf16.mxu0 0
    %420 = vmatpush1.bf16.msra.mxu0 0
    %421 = vmatprep.mubr.bf16.mxu0 0
    %422 = vmatmul.mubr.bf16.gmra.mrb[0].mxu0 %v384
    %v423 = vpop.f32.mrb[0].mxu0
    %v424 = vadd.f32 %v374, %v423
    %v425 = vpop.f32.mrb[0].mxu0
    %v426 = vpop.f32.mrb[0].mxu0
    %v427 = vadd.f32 %v374, %v426
    %v428 = vpop.f32.mrb[0].mxu0
    %429 = vmatprep.mubr.bf16.mxu0 0
    %430 = vmatmul.mubr.bf16.gmra.mrb[0].mxu0 %v387
    %v431 = vpop.f32.mrb[0].mxu0
    %v432 = vadd.f32 %v374, %v431
    %v433 = vpop.f32.mrb[0].mxu0
    %v434 = vpop.f32.mrb[0].mxu0
    %v435 = vadd.f32 %v374, %v434
    %v436 = vpop.f32.mrb[0].mxu0
    %437 = vdwg.mxu0
    %v438 = vmax.f32 %v424, 0.0
    %v439 = vmax.f32 %v427, 0.0
    %v440 = vmax.f32 %v432, 0.0
    %v441 = vmax.f32 %v435, 0.0
    %v442 = vpack.c.bf16 %v439, %v438
    %v443 = vpack.c.bf16 %v441, %v440
    %444 = vrot.lane.b32.xlu0 %v164, 32
    %v445 = vpop.permute.xlu0 %444
    %446 = vrot.lane.b32.xlu0 %v165, 32
    %v447 = vpop.permute.xlu0 %446
    %v451 = vsel %vm168, %v442, 0
    %v454 = vsel %vm168, %v443, 0
    %456 = vmatprep.subr.bf16.mxu0 0
    %457 = vmatpush1.bf16.msra.mxu0 %v445
    %458 = vmatprep.subr.bf16.mxu0 0
    %459 = vmatpush1.bf16.msra.mxu0 %v447
    %460 = vmatprep.subr.bf16.mxu0 0
    %461 = vmatpush1.bf16.msra.mxu0 0
    %462 = vmatprep.subr.bf16.mxu0 0
    %463 = vmatpush1.bf16.msra.mxu0 0
    %464 = vmatprep.subr.bf16.mxu0 0
    %465 = vmatpush1.bf16.msra.mxu0 0
    %466 = vmatprep.subr.bf16.mxu0 0
    %467 = vmatpush1.bf16.msra.mxu0 0
    %468 = vmatprep.subr.bf16.mxu0 0
    %469 = vmatpush1.bf16.msra.mxu0 0
    %470 = vmatprep.subr.bf16.mxu0 0
    %471 = vmatpush1.bf16.msra.mxu0 0
    %472 = vmatprep.subr.bf16.mxu0 0
    %473 = vmatpush1.bf16.msra.mxu0 0
    %474 = vmatprep.subr.bf16.mxu0 0
    %475 = vmatpush1.bf16.msra.mxu0 0
    %476 = vmatprep.subr.bf16.mxu0 0
    %477 = vmatpush1.bf16.msra.mxu0 0
    %478 = vmatprep.subr.bf16.mxu0 0
    %479 = vmatpush1.bf16.msra.mxu0 0
    %480 = vmatprep.subr.bf16.mxu0 0
    %481 = vmatpush1.bf16.msra.mxu0 0
    %482 = vmatprep.subr.bf16.mxu0 0
    %483 = vmatpush1.bf16.msra.mxu0 0
    %484 = vmatprep.subr.bf16.mxu0 0
    %485 = vmatpush1.bf16.msra.mxu0 0
    %486 = vmatprep.subr.bf16.mxu0 0
    %487 = vmatpush1.bf16.msra.mxu0 0
    %488 = vmatprep.mubr.bf16.mxu0 0
    %489 = vmatmul.mubr.bf16.gmra.mrb[0].mxu0 %v451
    %v490 = vpop.f32.mrb[0].mxu0
    %v491 = vadd.f32 0.0, %v490
    %v492 = vpop.f32.mrb[0].mxu0
    %v493 = vpop.f32.mrb[0].mxu0
    %v494 = vadd.f32 0.0, %v493
    %v495 = vpop.f32.mrb[0].mxu0
    %496 = vmatprep.mubr.bf16.mxu0 0
    %497 = vmatmul.mubr.bf16.gmra.mrb[0].mxu0 %v454
    %v498 = vpop.f32.mrb[0].mxu0
    %v499 = vadd.f32 0.0, %v498
    %v500 = vpop.f32.mrb[0].mxu0
    %v501 = vpop.f32.mrb[0].mxu0
    %v502 = vadd.f32 0.0, %v501
    %v503 = vpop.f32.mrb[0].mxu0
    %504 = vdwg.mxu0
    %v505 = vpack.c.bf16 %v494, %v491
    %v506 = vpack.c.bf16 %v502, %v499
    %v507 = vld [vmem:[#allocation4 + $0x5] sm:$0x1]
    %v508 = vlaneseq
    %v509 = vshrl.u32 %v508, 7
    %v510 = vsub.s32 0, %v509
    %v511 = vrot.slane %v507, %v510
    %512 = vmatprep.subr.bf16.mxu0 0
    %513 = vmatpush1.bf16.msra.mxu0 %v505
    %514 = vmatprep.subr.bf16.mxu0 0
    %515 = vmatpush1.bf16.msra.mxu0 %v506
    %516 = vmatprep.subr.bf16.mxu0 0
    %517 = vmatpush1.bf16.msra.mxu0 0
    %518 = vmatprep.subr.bf16.mxu0 0
    %519 = vmatpush1.bf16.msra.mxu0 0
    %520 = vmatprep.subr.bf16.mxu0 0
    %521 = vmatpush1.bf16.msra.mxu0 0
    %522 = vmatprep.subr.bf16.mxu0 0
    %523 = vmatpush1.bf16.msra.mxu0 0
    %524 = vmatprep.subr.bf16.mxu0 0
    %525 = vmatpush1.bf16.msra.mxu0 0
    %526 = vmatprep.subr.bf16.mxu0 0
    %527 = vmatpush1.bf16.msra.mxu0 0
    %528 = vmatprep.subr.bf16.mxu0 0
    %529 = vmatpush1.bf16.msra.mxu0 0
    %530 = vmatprep.subr.bf16.mxu0 0
    %531 = vmatpush1.bf16.msra.mxu0 0
    %532 = vmatprep.subr.bf16.mxu0 0
    %533 = vmatpush1.bf16.msra.mxu0 0
    %534 = vmatprep.subr.bf16.mxu0 0
    %535 = vmatpush1.bf16.msra.mxu0 0
    %536 = vmatprep.subr.bf16.mxu0 0
    %537 = vmatpush1.bf16.msra.mxu0 0
    %538 = vmatprep.subr.bf16.mxu0 0
    %539 = vmatpush1.bf16.msra.mxu0 0
    %540 = vmatprep.subr.bf16.mxu0 0
    %541 = vmatpush1.bf16.msra.mxu0 0
    %542 = vmatprep.subr.bf16.mxu0 0
    %543 = vmatpush1.bf16.msra.mxu0 0
    %544 = vmatprep.mubr.bf16.mxu0 0
    %545 = vmatmul.mubr.bf16.gmra.mrb[0].mxu0 %v384
    %v546 = vpop.f32.mrb[0].mxu0
    %v547 = vadd.f32 %v511, %v546
    %v548 = vpop.f32.mrb[0].mxu0
    %v549 = vpop.f32.mrb[0].mxu0
    %v550 = vadd.f32 %v511, %v549
    %v551 = vpop.f32.mrb[0].mxu0
    %552 = vmatprep.mubr.bf16.mxu0 0
    %553 = vmatmul.mubr.bf16.gmra.mrb[0].mxu0 %v387
    %v554 = vpop.f32.mrb[0].mxu0
    %v555 = vadd.f32 %v511, %v554
    %v556 = vpop.f32.mrb[0].mxu0
    %v557 = vpop.f32.mrb[0].mxu0
    %v558 = vadd.f32 %v511, %v557
    %v559 = vpop.f32.mrb[0].mxu0
    %560 = vdwg.mxu0
    %v561 = vmax.f32 %v547, 0.0
    %v562 = vmax.f32 %v550, 0.0
    %v563 = vmax.f32 %v555, 0.0
    %v564 = vmax.f32 %v558, 0.0
    %v565 = vld [vmem:[%s4 + $0x10] sm:$0xf]
    %v566 = vld [vmem:[%s4 + $0x14] sm:$0xf]
    %v567 = vld [vmem:[%s4 + $0x18] sm:$0xf]
    %v568 = vld [vmem:[%s4 + $0x1c] sm:$0xf]
    %v569 = vpack.c.bf16 %v562, %v561
    %v570 = vpack.c.bf16 %v564, %v563
    %v571 = vld [vmem:[#allocation4 + $0x6] sm:$0x1]
    %v572 = vlaneseq
    %v573 = vshrl.u32 %v572, 7
    %v574 = vsub.s32 0, %v573
    %v575 = vrot.slane %v571, %v574
    %v580 = vunpack.c.l.b16 %v565
    %v581 = vunpack.c.l.b16 %v566
    %v582 = vunpack.c.l.b16 %v567
    %v583 = vunpack.c.l.b16 %v568
    %v584 = vpack.c.b16 %v581, %v580
    %v585 = vpack.c.b16 %v583, %v582
    %v589 = vsel %vm168, %v569, 0
    %v592 = vsel %vm168, %v570, 0
    %594 = vmatprep.subr.bf16.mxu0 0
    %595 = vmatpush1.bf16.msra.mxu0 %v584
    %596 = vmatprep.subr.bf16.mxu0 0
    %597 = vmatpush1.bf16.msra.mxu0 %v585
    %598 = vmatprep.subr.bf16.mxu0 0
    %599 = vmatpush1.bf16.msra.mxu0 0
    %600 = vmatprep.subr.bf16.mxu0 0
    %601 = vmatpush1.bf16.msra.mxu0 0
    %602 = vmatprep.subr.bf16.mxu0 0
    %603 = vmatpush1.bf16.msra.mxu0 0
    %604 = vmatprep.subr.bf16.mxu0 0
    %605 = vmatpush1.bf16.msra.mxu0 0
    %606 = vmatprep.subr.bf16.mxu0 0
    %607 = vmatpush1.bf16.msra.mxu0 0
    %608 = vmatprep.subr.bf16.mxu0 0
    %609 = vmatpush1.bf16.msra.mxu0 0
    %610 = vmatprep.subr.bf16.mxu0 0
    %611 = vmatpush1.bf16.msra.mxu0 0
    %612 = vmatprep.subr.bf16.mxu0 0
    %613 = vmatpush1.bf16.msra.mxu0 0
    %614 = vmatprep.subr.bf16.mxu0 0
    %615 = vmatpush1.bf16.msra.mxu0 0
    %616 = vmatprep.subr.bf16.mxu0 0
    %617 = vmatpush1.bf16.msra.mxu0 0
    %618 = vmatprep.subr.bf16.mxu0 0
    %619 = vmatpush1.bf16.msra.mxu0 0
    %620 = vmatprep.subr.bf16.mxu0 0
    %621 = vmatpush1.bf16.msra.mxu0 0
    %622 = vmatprep.subr.bf16.mxu0 0
    %623 = vmatpush1.bf16.msra.mxu0 0
    %624 = vmatprep.subr.bf16.mxu0 0
    %625 = vmatpush1.bf16.msra.mxu0 0
    %626 = vmatprep.mubr.bf16.mxu0 0
    %627 = vmatmul.mubr.bf16.gmra.mrb[0].mxu0 %v589
    %v628 = vpop.f32.mrb[0].mxu0
    %v629 = vadd.f32 %v575, %v628
    %v630 = vpop.f32.mrb[0].mxu0
    %v631 = vpop.f32.mrb[0].mxu0
    %v632 = vadd.f32 %v575, %v631
    %v633 = vpop.f32.mrb[0].mxu0
    %634 = vmatprep.mubr.bf16.mxu0 0
    %635 = vmatmul.mubr.bf16.gmra.mrb[0].mxu0 %v592
    %v636 = vpop.f32.mrb[0].mxu0
    %v637 = vadd.f32 %v575, %v636
    %v638 = vpop.f32.mrb[0].mxu0
    %v639 = vpop.f32.mrb[0].mxu0
    %v640 = vadd.f32 %v575, %v639
    %v641 = vpop.f32.mrb[0].mxu0
    %642 = vdwg.mxu0
    %v643 = vmax.f32 %v629, 0.0
    %v644 = vmax.f32 %v632, 0.0
    %v645 = vmax.f32 %v637, 0.0
    %v646 = vmax.f32 %v640, 0.0
    %v647 = vpack.c.bf16 %v644, %v643
    %v648 = vpack.c.bf16 %v646, %v645
    %v649 = vld [vmem:[#allocation4 + $0x7] sm:$0x1]
    %v650 = vlaneseq
    %v651 = vshrl.u32 %v650, 7
    %v652 = vsub.s32 0, %v651
    %v653 = vrot.slane %v649, %v652
    %654 = vrot.lane.b32.xlu0 %v584, 96
    %v655 = vpop.permute.xlu0 %654
    %656 = vrot.lane.b32.xlu0 %v585, 96
    %v657 = vpop.permute.xlu0 %656
    %v661 = vsel %vm168, %v647, 0
    %v664 = vsel %vm168, %v648, 0
    %666 = vmatprep.subr.bf16.mxu0 0
    %667 = vmatpush1.bf16.msra.mxu0 %v655
    %668 = vmatprep.subr.bf16.mxu0 0
    %669 = vmatpush1.bf16.msra.mxu0 %v657
    %670 = vmatprep.subr.bf16.mxu0 0
    %671 = vmatpush1.bf16.msra.mxu0 0
    %672 = vmatprep.subr.bf16.mxu0 0
    %673 = vmatpush1.bf16.msra.mxu0 0
    %674 = vmatprep.subr.bf16.mxu0 0
    %675 = vmatpush1.bf16.msra.mxu0 0
    %676 = vmatprep.subr.bf16.mxu0 0
    %677 = vmatpush1.bf16.msra.mxu0 0
    %678 = vmatprep.subr.bf16.mxu0 0
    %679 = vmatpush1.bf16.msra.mxu0 0
    %680 = vmatprep.subr.bf16.mxu0 0
    %681 = vmatpush1.bf16.msra.mxu0 0
    %682 = vmatprep.subr.bf16.mxu0 0
    %683 = vmatpush1.bf16.msra.mxu0 0
    %684 = vmatprep.subr.bf16.mxu0 0
    %685 = vmatpush1.bf16.msra.mxu0 0
    %686 = vmatprep.subr.bf16.mxu0 0
    %687 = vmatpush1.bf16.msra.mxu0 0
    %688 = vmatprep.subr.bf16.mxu0 0
    %689 = vmatpush1.bf16.msra.mxu0 0
    %690 = vmatprep.subr.bf16.mxu0 0
    %691 = vmatpush1.bf16.msra.mxu0 0
    %692 = vmatprep.subr.bf16.mxu0 0
    %693 = vmatpush1.bf16.msra.mxu0 0
    %694 = vmatprep.subr.bf16.mxu0 0
    %695 = vmatpush1.bf16.msra.mxu0 0
    %696 = vmatprep.subr.bf16.mxu0 0
    %697 = vmatpush1.bf16.msra.mxu0 0
    %698 = vmatprep.mubr.bf16.mxu0 0
    %699 = vmatmul.mubr.bf16.gmra.mrb[0].mxu0 %v661
    %v700 = vpop.f32.mrb[0].mxu0
    %v701 = vadd.f32 %v653, %v700
    %v702 = vpop.f32.mrb[0].mxu0
    %v703 = vpop.f32.mrb[0].mxu0
    %v704 = vadd.f32 %v653, %v703
    %v705 = vpop.f32.mrb[0].mxu0
    %706 = vmatprep.mubr.bf16.mxu0 0
    %707 = vmatmul.mubr.bf16.gmra.mrb[0].mxu0 %v664
    %v708 = vpop.f32.mrb[0].mxu0
    %v709 = vadd.f32 %v653, %v708
    %v710 = vpop.f32.mrb[0].mxu0
    %v711 = vpop.f32.mrb[0].mxu0
    %v712 = vadd.f32 %v653, %v711
    %v713 = vpop.f32.mrb[0].mxu0
    %714 = vdwg.mxu0
    %v715 = vlaneseq
    %v716 = vshrl.u32 %v715, 7
    %v717 = vsub.s32 0, %v716
    %v718 = vrot.slane %v56, %v717
    %720 = vbcast.lane.b32.xlu0 %v718, 256
    %v721 = vpop.permute.xlu0 %720
    %s723 = sor.u32 256, 8
    %724 = vbcast.lane.b32.xlu0 %v718, %s723
    %v725 = vpop.permute.xlu0 %724
    %s727 = sor.u32 256, 16
    %728 = vbcast.lane.b32.xlu0 %v718, %s727
    %v729 = vpop.permute.xlu0 %728
    %s731 = sor.u32 256, 24
    %732 = vbcast.lane.b32.xlu0 %v718, %s731
    %v733 = vpop.permute.xlu0 %732
    %v734 = vlaneseq
    %v735 = vshrl.u32 %v734, 7
    %v736 = vsub.s32 1, %v735
    %v737 = vrot.slane %v56, %v736
    %739 = vbcast.lane.b32.xlu0 %v737, 256
    %v740 = vpop.permute.xlu0 %739
    %s742 = sor.u32 256, 8
    %743 = vbcast.lane.b32.xlu0 %v737, %s742
    %v744 = vpop.permute.xlu0 %743
    %s746 = sor.u32 256, 16
    %747 = vbcast.lane.b32.xlu0 %v737, %s746
    %v748 = vpop.permute.xlu0 %747
    %s750 = sor.u32 256, 24
    %751 = vbcast.lane.b32.xlu0 %v737, %s750
    %v752 = vpop.permute.xlu0 %751
    %v753 = vlaneseq
    %v754 = vshrl.u32 %v753, 7
    %v755 = vsub.s32 2, %v754
    %v756 = vrot.slane %v56, %v755
    %758 = vbcast.lane.b32.xlu0 %v756, 256
    %v759 = vpop.permute.xlu0 %758
    %s761 = sor.u32 256, 8
    %762 = vbcast.lane.b32.xlu0 %v756, %s761
    %v763 = vpop.permute.xlu0 %762
    %s765 = sor.u32 256, 16
    %766 = vbcast.lane.b32.xlu0 %v756, %s765
    %v767 = vpop.permute.xlu0 %766
    %s769 = sor.u32 256, 24
    %770 = vbcast.lane.b32.xlu0 %v756, %s769
    %v771 = vpop.permute.xlu0 %770
    %v772 = vlaneseq
    %v773 = vshrl.u32 %v772, 7
    %v774 = vsub.s32 3, %v773
    %v775 = vrot.slane %v56, %v774
    %777 = vbcast.lane.b32.xlu0 %v775, 256
    %v778 = vpop.permute.xlu0 %777
    %s780 = sor.u32 256, 8
    %781 = vbcast.lane.b32.xlu0 %v775, %s780
    %v782 = vpop.permute.xlu0 %781
    %s784 = sor.u32 256, 16
    %785 = vbcast.lane.b32.xlu0 %v775, %s784
    %v786 = vpop.permute.xlu0 %785
    %s788 = sor.u32 256, 24
    %789 = vbcast.lane.b32.xlu0 %v775, %s788
    %v790 = vpop.permute.xlu0 %789
    %v791 = vlaneseq
    %v792 = vshrl.u32 %v791, 7
    %v793 = vsub.s32 4, %v792
    %v794 = vrot.slane %v56, %v793
    %796 = vbcast.lane.b32.xlu0 %v794, 256
    %v797 = vpop.permute.xlu0 %796
    %s799 = sor.u32 256, 8
    %800 = vbcast.lane.b32.xlu0 %v794, %s799
    %v801 = vpop.permute.xlu0 %800
    %s803 = sor.u32 256, 16
    %804 = vbcast.lane.b32.xlu0 %v794, %s803
    %v805 = vpop.permute.xlu0 %804
    %s807 = sor.u32 256, 24
    %808 = vbcast.lane.b32.xlu0 %v794, %s807
    %v809 = vpop.permute.xlu0 %808
    %v810 = vlaneseq
    %v811 = vshrl.u32 %v810, 7
    %v812 = vsub.s32 5, %v811
    %v813 = vrot.slane %v56, %v812
    %815 = vbcast.lane.b32.xlu0 %v813, 256
    %v816 = vpop.permute.xlu0 %815
    %s818 = sor.u32 256, 8
    %819 = vbcast.lane.b32.xlu0 %v813, %s818
    %v820 = vpop.permute.xlu0 %819
    %s822 = sor.u32 256, 16
    %823 = vbcast.lane.b32.xlu0 %v813, %s822
    %v824 = vpop.permute.xlu0 %823
    %s826 = sor.u32 256, 24
    %827 = vbcast.lane.b32.xlu0 %v813, %s826
    %v828 = vpop.permute.xlu0 %827
    %v829 = vlaneseq
    %v830 = vshrl.u32 %v829, 7
    %v831 = vsub.s32 6, %v830
    %v832 = vrot.slane %v56, %v831
    %834 = vbcast.lane.b32.xlu0 %v832, 256
    %v835 = vpop.permute.xlu0 %834
    %s837 = sor.u32 256, 8
    %838 = vbcast.lane.b32.xlu0 %v832, %s837
    %v839 = vpop.permute.xlu0 %838
    %s841 = sor.u32 256, 16
    %842 = vbcast.lane.b32.xlu0 %v832, %s841
    %v843 = vpop.permute.xlu0 %842
    %s845 = sor.u32 256, 24
    %846 = vbcast.lane.b32.xlu0 %v832, %s845
    %v847 = vpop.permute.xlu0 %846
    %v848 = vlaneseq
    %v849 = vshrl.u32 %v848, 7
    %v850 = vsub.s32 7, %v849
    %v851 = vrot.slane %v56, %v850
    %853 = vbcast.lane.b32.xlu0 %v851, 256
    %v854 = vpop.permute.xlu0 %853
    %s856 = sor.u32 256, 8
    %857 = vbcast.lane.b32.xlu0 %v851, %s856
    %v858 = vpop.permute.xlu0 %857
    %s860 = sor.u32 256, 16
    %861 = vbcast.lane.b32.xlu0 %v851, %s860
    %v862 = vpop.permute.xlu0 %861
    %s864 = sor.u32 256, 24
    %865 = vbcast.lane.b32.xlu0 %v851, %s864
    %v866 = vpop.permute.xlu0 %865
    %v867 = vlaneseq
    %v868 = vshrl.u32 %v867, 7
    %v869 = vsub.s32 0, %v868
    %v870 = vrot.slane %v57, %v869
    %872 = vbcast.lane.b32.xlu0 %v870, 256
    %v873 = vpop.permute.xlu0 %872
    %s875 = sor.u32 256, 8
    %876 = vbcast.lane.b32.xlu0 %v870, %s875
    %v877 = vpop.permute.xlu0 %876
    %s879 = sor.u32 256, 16
    %880 = vbcast.lane.b32.xlu0 %v870, %s879
    %v881 = vpop.permute.xlu0 %880
    %s883 = sor.u32 256, 24
    %884 = vbcast.lane.b32.xlu0 %v870, %s883
    %v885 = vpop.permute.xlu0 %884
    %v886 = vlaneseq
    %v887 = vshrl.u32 %v886, 7
    %v888 = vsub.s32 1, %v887
    %v889 = vrot.slane %v57, %v888
    %891 = vbcast.lane.b32.xlu0 %v889, 256
    %v892 = vpop.permute.xlu0 %891
    %s894 = sor.u32 256, 8
    %895 = vbcast.lane.b32.xlu0 %v889, %s894
    %v896 = vpop.permute.xlu0 %895
    %s898 = sor.u32 256, 16
    %899 = vbcast.lane.b32.xlu0 %v889, %s898
    %v900 = vpop.permute.xlu0 %899
    %s902 = sor.u32 256, 24
    %903 = vbcast.lane.b32.xlu0 %v889, %s902
    %v904 = vpop.permute.xlu0 %903
    %v905 = vlaneseq
    %v906 = vshrl.u32 %v905, 7
    %v907 = vsub.s32 2, %v906
    %v908 = vrot.slane %v57, %v907
    %910 = vbcast.lane.b32.xlu0 %v908, 256
    %v911 = vpop.permute.xlu0 %910
    %s913 = sor.u32 256, 8
    %914 = vbcast.lane.b32.xlu0 %v908, %s913
    %v915 = vpop.permute.xlu0 %914
    %s917 = sor.u32 256, 16
    %918 = vbcast.lane.b32.xlu0 %v908, %s917
    %v919 = vpop.permute.xlu0 %918
    %s921 = sor.u32 256, 24
    %922 = vbcast.lane.b32.xlu0 %v908, %s921
    %v923 = vpop.permute.xlu0 %922
    %v924 = vlaneseq
    %v925 = vshrl.u32 %v924, 7
    %v926 = vsub.s32 3, %v925
    %v927 = vrot.slane %v57, %v926
    %929 = vbcast.lane.b32.xlu0 %v927, 256
    %v930 = vpop.permute.xlu0 %929
    %s932 = sor.u32 256, 8
    %933 = vbcast.lane.b32.xlu0 %v927, %s932
    %v934 = vpop.permute.xlu0 %933
    %s936 = sor.u32 256, 16
    %937 = vbcast.lane.b32.xlu0 %v927, %s936
    %v938 = vpop.permute.xlu0 %937
    %s940 = sor.u32 256, 24
    %941 = vbcast.lane.b32.xlu0 %v927, %s940
    %v942 = vpop.permute.xlu0 %941
    %v943 = vlaneseq
    %v944 = vshrl.u32 %v943, 7
    %v945 = vsub.s32 4, %v944
    %v946 = vrot.slane %v57, %v945
    %948 = vbcast.lane.b32.xlu0 %v946, 256
    %v949 = vpop.permute.xlu0 %948
    %s951 = sor.u32 256, 8
    %952 = vbcast.lane.b32.xlu0 %v946, %s951
    %v953 = vpop.permute.xlu0 %952
    %s955 = sor.u32 256, 16
    %956 = vbcast.lane.b32.xlu0 %v946, %s955
    %v957 = vpop.permute.xlu0 %956
    %s959 = sor.u32 256, 24
    %960 = vbcast.lane.b32.xlu0 %v946, %s959
    %v961 = vpop.permute.xlu0 %960
    %v962 = vlaneseq
    %v963 = vshrl.u32 %v962, 7
    %v964 = vsub.s32 5, %v963
    %v965 = vrot.slane %v57, %v964
    %967 = vbcast.lane.b32.xlu0 %v965, 256
    %v968 = vpop.permute.xlu0 %967
    %s970 = sor.u32 256, 8
    %971 = vbcast.lane.b32.xlu0 %v965, %s970
    %v972 = vpop.permute.xlu0 %971
    %s974 = sor.u32 256, 16
    %975 = vbcast.lane.b32.xlu0 %v965, %s974
    %v976 = vpop.permute.xlu0 %975
    %s978 = sor.u32 256, 24
    %979 = vbcast.lane.b32.xlu0 %v965, %s978
    %v980 = vpop.permute.xlu0 %979
    %v981 = vlaneseq
    %v982 = vshrl.u32 %v981, 7
    %v983 = vsub.s32 6, %v982
    %v984 = vrot.slane %v57, %v983
    %986 = vbcast.lane.b32.xlu0 %v984, 256
    %v987 = vpop.permute.xlu0 %986
    %s989 = sor.u32 256, 8
    %990 = vbcast.lane.b32.xlu0 %v984, %s989
    %v991 = vpop.permute.xlu0 %990
    %s993 = sor.u32 256, 16
    %994 = vbcast.lane.b32.xlu0 %v984, %s993
    %v995 = vpop.permute.xlu0 %994
    %s997 = sor.u32 256, 24
    %998 = vbcast.lane.b32.xlu0 %v984, %s997
    %v999 = vpop.permute.xlu0 %998
    %v1000 = vlaneseq
    %v1001 = vshrl.u32 %v1000, 7
    %v1002 = vsub.s32 7, %v1001
    %v1003 = vrot.slane %v57, %v1002
    %1005 = vbcast.lane.b32.xlu0 %v1003, 256
    %v1006 = vpop.permute.xlu0 %1005
    %s1008 = sor.u32 256, 8
    %1009 = vbcast.lane.b32.xlu0 %v1003, %s1008
    %v1010 = vpop.permute.xlu0 %1009
    %s1012 = sor.u32 256, 16
    %1013 = vbcast.lane.b32.xlu0 %v1003, %s1012
    %v1014 = vpop.permute.xlu0 %1013
    %s1016 = sor.u32 256, 24
    %1017 = vbcast.lane.b32.xlu0 %v1003, %s1016
    %v1018 = vpop.permute.xlu0 %1017
    %v1019 = vlaneseq
    %v1020 = vshrl.u32 %v1019, 7
    %v1021 = vsub.s32 0, %v1020
    %v1022 = vrot.slane %v58, %v1021
    %1024 = vbcast.lane.b32.xlu0 %v1022, 256
    %v1025 = vpop.permute.xlu0 %1024
    %s1027 = sor.u32 256, 8
    %1028 = vbcast.lane.b32.xlu0 %v1022, %s1027
    %v1029 = vpop.permute.xlu0 %1028
    %s1031 = sor.u32 256, 16
    %1032 = vbcast.lane.b32.xlu0 %v1022, %s1031
    %v1033 = vpop.permute.xlu0 %1032
    %s1035 = sor.u32 256, 24
    %1036 = vbcast.lane.b32.xlu0 %v1022, %s1035
    %v1037 = vpop.permute.xlu0 %1036
    %v1038 = vlaneseq
    %v1039 = vshrl.u32 %v1038, 7
    %v1040 = vsub.s32 1, %v1039
    %v1041 = vrot.slane %v58, %v1040
    %1043 = vbcast.lane.b32.xlu0 %v1041, 256
    %v1044 = vpop.permute.xlu0 %1043
    %s1046 = sor.u32 256, 8
    %1047 = vbcast.lane.b32.xlu0 %v1041, %s1046
    %v1048 = vpop.permute.xlu0 %1047
    %s1050 = sor.u32 256, 16
    %1051 = vbcast.lane.b32.xlu0 %v1041, %s1050
    %v1052 = vpop.permute.xlu0 %1051
    %s1054 = sor.u32 256, 24
    %1055 = vbcast.lane.b32.xlu0 %v1041, %s1054
    %v1056 = vpop.permute.xlu0 %1055
    %v1057 = vlaneseq
    %v1058 = vshrl.u32 %v1057, 7
    %v1059 = vsub.s32 2, %v1058
    %v1060 = vrot.slane %v58, %v1059
    %1062 = vbcast.lane.b32.xlu0 %v1060, 256
    %v1063 = vpop.permute.xlu0 %1062
    %s1065 = sor.u32 256, 8
    %1066 = vbcast.lane.b32.xlu0 %v1060, %s1065
    %v1067 = vpop.permute.xlu0 %1066
    %s1069 = sor.u32 256, 16
    %1070 = vbcast.lane.b32.xlu0 %v1060, %s1069
    %v1071 = vpop.permute.xlu0 %1070
    %s1073 = sor.u32 256, 24
    %1074 = vbcast.lane.b32.xlu0 %v1060, %s1073
    %v1075 = vpop.permute.xlu0 %1074
    %v1076 = vlaneseq
    %v1077 = vshrl.u32 %v1076, 7
    %v1078 = vsub.s32 3, %v1077
    %v1079 = vrot.slane %v58, %v1078
    %1081 = vbcast.lane.b32.xlu0 %v1079, 256
    %v1082 = vpop.permute.xlu0 %1081
    %s1084 = sor.u32 256, 8
    %1085 = vbcast.lane.b32.xlu0 %v1079, %s1084
    %v1086 = vpop.permute.xlu0 %1085
    %s1088 = sor.u32 256, 16
    %1089 = vbcast.lane.b32.xlu0 %v1079, %s1088
    %v1090 = vpop.permute.xlu0 %1089
    %s1092 = sor.u32 256, 24
    %1093 = vbcast.lane.b32.xlu0 %v1079, %s1092
    %v1094 = vpop.permute.xlu0 %1093
    %v1095 = vlaneseq
    %v1096 = vshrl.u32 %v1095, 7
    %v1097 = vsub.s32 4, %v1096
    %v1098 = vrot.slane %v58, %v1097
    %1100 = vbcast.lane.b32.xlu0 %v1098, 256
    %v1101 = vpop.permute.xlu0 %1100
    %s1103 = sor.u32 256, 8
    %1104 = vbcast.lane.b32.xlu0 %v1098, %s1103
    %v1105 = vpop.permute.xlu0 %1104
    %s1107 = sor.u32 256, 16
    %1108 = vbcast.lane.b32.xlu0 %v1098, %s1107
    %v1109 = vpop.permute.xlu0 %1108
    %s1111 = sor.u32 256, 24
    %1112 = vbcast.lane.b32.xlu0 %v1098, %s1111
    %v1113 = vpop.permute.xlu0 %1112
    %v1114 = vlaneseq
    %v1115 = vshrl.u32 %v1114, 7
    %v1116 = vsub.s32 5, %v1115
    %v1117 = vrot.slane %v58, %v1116
    %1119 = vbcast.lane.b32.xlu0 %v1117, 256
    %v1120 = vpop.permute.xlu0 %1119
    %s1122 = sor.u32 256, 8
    %1123 = vbcast.lane.b32.xlu0 %v1117, %s1122
    %v1124 = vpop.permute.xlu0 %1123
    %s1126 = sor.u32 256, 16
    %1127 = vbcast.lane.b32.xlu0 %v1117, %s1126
    %v1128 = vpop.permute.xlu0 %1127
    %s1130 = sor.u32 256, 24
    %1131 = vbcast.lane.b32.xlu0 %v1117, %s1130
    %v1132 = vpop.permute.xlu0 %1131
    %v1133 = vlaneseq
    %v1134 = vshrl.u32 %v1133, 7
    %v1135 = vsub.s32 6, %v1134
    %v1136 = vrot.slane %v58, %v1135
    %1138 = vbcast.lane.b32.xlu0 %v1136, 256
    %v1139 = vpop.permute.xlu0 %1138
    %s1141 = sor.u32 256, 8
    %1142 = vbcast.lane.b32.xlu0 %v1136, %s1141
    %v1143 = vpop.permute.xlu0 %1142
    %s1145 = sor.u32 256, 16
    %1146 = vbcast.lane.b32.xlu0 %v1136, %s1145
    %v1147 = vpop.permute.xlu0 %1146
    %s1149 = sor.u32 256, 24
    %1150 = vbcast.lane.b32.xlu0 %v1136, %s1149
    %v1151 = vpop.permute.xlu0 %1150
    %v1152 = vlaneseq
    %v1153 = vshrl.u32 %v1152, 7
    %v1154 = vsub.s32 7, %v1153
    %v1155 = vrot.slane %v58, %v1154
    %1157 = vbcast.lane.b32.xlu0 %v1155, 256
    %v1158 = vpop.permute.xlu0 %1157
    %s1160 = sor.u32 256, 8
    %1161 = vbcast.lane.b32.xlu0 %v1155, %s1160
    %v1162 = vpop.permute.xlu0 %1161
    %s1164 = sor.u32 256, 16
    %1165 = vbcast.lane.b32.xlu0 %v1155, %s1164
    %v1166 = vpop.permute.xlu0 %1165
    %s1168 = sor.u32 256, 24
    %1169 = vbcast.lane.b32.xlu0 %v1155, %s1168
    %v1170 = vpop.permute.xlu0 %1169
    %v1171 = vlaneseq
    %v1172 = vshrl.u32 %v1171, 7
    %v1173 = vsub.s32 0, %v1172
    %v1174 = vrot.slane %v59, %v1173
    %1176 = vbcast.lane.b32.xlu0 %v1174, 256
    %v1177 = vpop.permute.xlu0 %1176
    %s1179 = sor.u32 256, 8
    %1180 = vbcast.lane.b32.xlu0 %v1174, %s1179
    %v1181 = vpop.permute.xlu0 %1180
    %s1183 = sor.u32 256, 16
    %1184 = vbcast.lane.b32.xlu0 %v1174, %s1183
    %v1185 = vpop.permute.xlu0 %1184
    %s1187 = sor.u32 256, 24
    %1188 = vbcast.lane.b32.xlu0 %v1174, %s1187
    %v1189 = vpop.permute.xlu0 %1188
    %v1190 = vlaneseq
    %v1191 = vshrl.u32 %v1190, 7
    %v1192 = vsub.s32 1, %v1191
    %v1193 = vrot.slane %v59, %v1192
    %1195 = vbcast.lane.b32.xlu0 %v1193, 256
    %v1196 = vpop.permute.xlu0 %1195
    %s1198 = sor.u32 256, 8
    %1199 = vbcast.lane.b32.xlu0 %v1193, %s1198
    %v1200 = vpop.permute.xlu0 %1199
    %s1202 = sor.u32 256, 16
    %1203 = vbcast.lane.b32.xlu0 %v1193, %s1202
    %v1204 = vpop.permute.xlu0 %1203
    %s1206 = sor.u32 256, 24
    %1207 = vbcast.lane.b32.xlu0 %v1193, %s1206
    %v1208 = vpop.permute.xlu0 %1207
    %v1209 = vlaneseq
    %v1210 = vshrl.u32 %v1209, 7
    %v1211 = vsub.s32 2, %v1210
    %v1212 = vrot.slane %v59, %v1211
    %1214 = vbcast.lane.b32.xlu0 %v1212, 256
    %v1215 = vpop.permute.xlu0 %1214
    %s1217 = sor.u32 256, 8
    %1218 = vbcast.lane.b32.xlu0 %v1212, %s1217
    %v1219 = vpop.permute.xlu0 %1218
    %s1221 = sor.u32 256, 16
    %1222 = vbcast.lane.b32.xlu0 %v1212, %s1221
    %v1223 = vpop.permute.xlu0 %1222
    %s1225 = sor.u32 256, 24
    %1226 = vbcast.lane.b32.xlu0 %v1212, %s1225
    %v1227 = vpop.permute.xlu0 %1226
    %v1228 = vlaneseq
    %v1229 = vshrl.u32 %v1228, 7
    %v1230 = vsub.s32 3, %v1229
    %v1231 = vrot.slane %v59, %v1230
    %1233 = vbcast.lane.b32.xlu0 %v1231, 256
    %v1234 = vpop.permute.xlu0 %1233
    %s1236 = sor.u32 256, 8
    %1237 = vbcast.lane.b32.xlu0 %v1231, %s1236
    %v1238 = vpop.permute.xlu0 %1237
    %s1240 = sor.u32 256, 16
    %1241 = vbcast.lane.b32.xlu0 %v1231, %s1240
    %v1242 = vpop.permute.xlu0 %1241
    %s1244 = sor.u32 256, 24
    %1245 = vbcast.lane.b32.xlu0 %v1231, %s1244
    %v1246 = vpop.permute.xlu0 %1245
    %v1247 = vlaneseq
    %v1248 = vshrl.u32 %v1247, 7
    %v1249 = vsub.s32 4, %v1248
    %v1250 = vrot.slane %v59, %v1249
    %1252 = vbcast.lane.b32.xlu0 %v1250, 256
    %v1253 = vpop.permute.xlu0 %1252
    %s1255 = sor.u32 256, 8
    %1256 = vbcast.lane.b32.xlu0 %v1250, %s1255
    %v1257 = vpop.permute.xlu0 %1256
    %s1259 = sor.u32 256, 16
    %1260 = vbcast.lane.b32.xlu0 %v1250, %s1259
    %v1261 = vpop.permute.xlu0 %1260
    %s1263 = sor.u32 256, 24
    %1264 = vbcast.lane.b32.xlu0 %v1250, %s1263
    %v1265 = vpop.permute.xlu0 %1264
    %v1266 = vlaneseq
    %v1267 = vshrl.u32 %v1266, 7
    %v1268 = vsub.s32 5, %v1267
    %v1269 = vrot.slane %v59, %v1268
    %1271 = vbcast.lane.b32.xlu0 %v1269, 256
    %v1272 = vpop.permute.xlu0 %1271
    %s1274 = sor.u32 256, 8
    %1275 = vbcast.lane.b32.xlu0 %v1269, %s1274
    %v1276 = vpop.permute.xlu0 %1275
    %s1278 = sor.u32 256, 16
    %1279 = vbcast.lane.b32.xlu0 %v1269, %s1278
    %v1280 = vpop.permute.xlu0 %1279
    %s1282 = sor.u32 256, 24
    %1283 = vbcast.lane.b32.xlu0 %v1269, %s1282
    %v1284 = vpop.permute.xlu0 %1283
    %v1285 = vlaneseq
    %v1286 = vshrl.u32 %v1285, 7
    %v1287 = vsub.s32 6, %v1286
    %v1288 = vrot.slane %v59, %v1287
    %1290 = vbcast.lane.b32.xlu0 %v1288, 256
    %v1291 = vpop.permute.xlu0 %1290
    %s1293 = sor.u32 256, 8
    %1294 = vbcast.lane.b32.xlu0 %v1288, %s1293
    %v1295 = vpop.permute.xlu0 %1294
    %s1297 = sor.u32 256, 16
    %1298 = vbcast.lane.b32.xlu0 %v1288, %s1297
    %v1299 = vpop.permute.xlu0 %1298
    %s1301 = sor.u32 256, 24
    %1302 = vbcast.lane.b32.xlu0 %v1288, %s1301
    %v1303 = vpop.permute.xlu0 %1302
    %v1304 = vlaneseq
    %v1305 = vshrl.u32 %v1304, 7
    %v1306 = vsub.s32 7, %v1305
    %v1307 = vrot.slane %v59, %v1306
    %1309 = vbcast.lane.b32.xlu0 %v1307, 256
    %v1310 = vpop.permute.xlu0 %1309
    %s1312 = sor.u32 256, 8
    %1313 = vbcast.lane.b32.xlu0 %v1307, %s1312
    %v1314 = vpop.permute.xlu0 %1313
    %s1316 = sor.u32 256, 16
    %1317 = vbcast.lane.b32.xlu0 %v1307, %s1316
    %v1318 = vpop.permute.xlu0 %1317
    %s1320 = sor.u32 256, 24
    %1321 = vbcast.lane.b32.xlu0 %v1307, %s1320
    %v1322 = vpop.permute.xlu0 %1321
    %vm1323 = vcmp.gt.f32.partialorder %v721, 0.0
    %vm1324 = vcmp.gt.f32.partialorder %v725, 0.0
    %vm1325 = vcmp.gt.f32.partialorder %v729, 0.0
    %vm1326 = vcmp.gt.f32.partialorder %v733, 0.0
    %vm1327 = vcmp.gt.f32.partialorder %v740, 0.0
    %vm1328 = vcmp.gt.f32.partialorder %v744, 0.0
    %vm1329 = vcmp.gt.f32.partialorder %v748, 0.0
    %vm1330 = vcmp.gt.f32.partialorder %v752, 0.0
    %vm1331 = vcmp.gt.f32.partialorder %v759, 0.0
    %vm1332 = vcmp.gt.f32.partialorder %v763, 0.0
    %vm1333 = vcmp.gt.f32.partialorder %v767, 0.0
    %vm1334 = vcmp.gt.f32.partialorder %v771, 0.0
    %vm1335 = vcmp.gt.f32.partialorder %v778, 0.0
    %vm1336 = vcmp.gt.f32.partialorder %v782, 0.0
    %vm1337 = vcmp.gt.f32.partialorder %v786, 0.0
    %vm1338 = vcmp.gt.f32.partialorder %v790, 0.0
    %vm1339 = vcmp.gt.f32.partialorder %v797, 0.0
    %vm1340 = vcmp.gt.f32.partialorder %v801, 0.0
    %vm1341 = vcmp.gt.f32.partialorder %v805, 0.0
    %vm1342 = vcmp.gt.f32.partialorder %v809, 0.0
    %vm1343 = vcmp.gt.f32.partialorder %v816, 0.0
    %vm1344 = vcmp.gt.f32.partialorder %v820, 0.0
    %vm1345 = vcmp.gt.f32.partialorder %v824, 0.0
    %vm1346 = vcmp.gt.f32.partialorder %v828, 0.0
    %vm1347 = vcmp.gt.f32.partialorder %v835, 0.0
    %vm1348 = vcmp.gt.f32.partialorder %v839, 0.0
    %vm1349 = vcmp.gt.f32.partialorder %v843, 0.0
    %vm1350 = vcmp.gt.f32.partialorder %v847, 0.0
    %vm1351 = vcmp.gt.f32.partialorder %v854, 0.0
    %vm1352 = vcmp.gt.f32.partialorder %v858, 0.0
    %vm1353 = vcmp.gt.f32.partialorder %v862, 0.0
    %vm1354 = vcmp.gt.f32.partialorder %v866, 0.0
    %vm1355 = vcmp.gt.f32.partialorder %v873, 0.0
    %vm1356 = vcmp.gt.f32.partialorder %v877, 0.0
    %vm1357 = vcmp.gt.f32.partialorder %v881, 0.0
    %vm1358 = vcmp.gt.f32.partialorder %v885, 0.0
    %vm1359 = vcmp.gt.f32.partialorder %v892, 0.0
    %vm1360 = vcmp.gt.f32.partialorder %v896, 0.0
    %vm1361 = vcmp.gt.f32.partialorder %v900, 0.0
    %vm1362 = vcmp.gt.f32.partialorder %v904, 0.0
    %vm1363 = vcmp.gt.f32.partialorder %v911, 0.0
    %vm1364 = vcmp.gt.f32.partialorder %v915, 0.0
    %vm1365 = vcmp.gt.f32.partialorder %v919, 0.0
    %vm1366 = vcmp.gt.f32.partialorder %v923, 0.0
    %vm1367 = vcmp.gt.f32.partialorder %v930, 0.0
    %vm1368 = vcmp.gt.f32.partialorder %v934, 0.0
    %vm1369 = vcmp.gt.f32.partialorder %v938, 0.0
    %vm1370 = vcmp.gt.f32.partialorder %v942, 0.0
    %vm1371 = vcmp.gt.f32.partialorder %v949, 0.0
    %vm1372 = vcmp.gt.f32.partialorder %v953, 0.0
    %vm1373 = vcmp.gt.f32.partialorder %v957, 0.0
    %vm1374 = vcmp.gt.f32.partialorder %v961, 0.0
    %vm1375 = vcmp.gt.f32.partialorder %v968, 0.0
    %vm1376 = vcmp.gt.f32.partialorder %v972, 0.0
    %vm1377 = vcmp.gt.f32.partialorder %v976, 0.0
    %vm1378 = vcmp.gt.f32.partialorder %v980, 0.0
    %vm1379 = vcmp.gt.f32.partialorder %v987, 0.0
    %vm1380 = vcmp.gt.f32.partialorder %v991, 0.0
    %vm1381 = vcmp.gt.f32.partialorder %v995, 0.0
    %vm1382 = vcmp.gt.f32.partialorder %v999, 0.0
    %vm1383 = vcmp.gt.f32.partialorder %v1006, 0.0
    %vm1384 = vcmp.gt.f32.partialorder %v1010, 0.0
    %vm1385 = vcmp.gt.f32.partialorder %v1014, 0.0
    %vm1386 = vcmp.gt.f32.partialorder %v1018, 0.0
    %vm1387 = vcmp.gt.f32.partialorder %v1025, 0.0
    %vm1388 = vcmp.gt.f32.partialorder %v1029, 0.0
    %vm1389 = vcmp.gt.f32.partialorder %v1033, 0.0
    %vm1390 = vcmp.gt.f32.partialorder %v1037, 0.0
    %vm1391 = vcmp.gt.f32.partialorder %v1044, 0.0
    %vm1392 = vcmp.gt.f32.partialorder %v1048, 0.0
    %vm1393 = vcmp.gt.f32.partialorder %v1052, 0.0
    %vm1394 = vcmp.gt.f32.partialorder %v1056, 0.0
    %vm1395 = vcmp.gt.f32.partialorder %v1063, 0.0
    %vm1396 = vcmp.gt.f32.partialorder %v1067, 0.0
    %vm1397 = vcmp.gt.f32.partialorder %v1071, 0.0
    %vm1398 = vcmp.gt.f32.partialorder %v1075, 0.0
    %vm1399 = vcmp.gt.f32.partialorder %v1082, 0.0
    %vm1400 = vcmp.gt.f32.partialorder %v1086, 0.0
    %vm1401 = vcmp.gt.f32.partialorder %v1090, 0.0
    %vm1402 = vcmp.gt.f32.partialorder %v1094, 0.0
    %vm1403 = vcmp.gt.f32.partialorder %v1101, 0.0
    %vm1404 = vcmp.gt.f32.partialorder %v1105, 0.0
    %vm1405 = vcmp.gt.f32.partialorder %v1109, 0.0
    %vm1406 = vcmp.gt.f32.partialorder %v1113, 0.0
    %vm1407 = vcmp.gt.f32.partialorder %v1120, 0.0
    %vm1408 = vcmp.gt.f32.partialorder %v1124, 0.0
    %vm1409 = vcmp.gt.f32.partialorder %v1128, 0.0
    %vm1410 = vcmp.gt.f32.partialorder %v1132, 0.0
    %vm1411 = vcmp.gt.f32.partialorder %v1139, 0.0
    %vm1412 = vcmp.gt.f32.partialorder %v1143, 0.0
    %vm1413 = vcmp.gt.f32.partialorder %v1147, 0.0
    %vm1414 = vcmp.gt.f32.partialorder %v1151, 0.0
    %vm1415 = vcmp.gt.f32.partialorder %v1158, 0.0
    %vm1416 = vcmp.gt.f32.partialorder %v1162, 0.0
    %vm1417 = vcmp.gt.f32.partialorder %v1166, 0.0
    %vm1418 = vcmp.gt.f32.partialorder %v1170, 0.0
    %vm1419 = vcmp.gt.f32.partialorder %v1177, 0.0
    %vm1420 = vcmp.gt.f32.partialorder %v1181, 0.0
    %vm1421 = vcmp.gt.f32.partialorder %v1185, 0.0
    %vm1422 = vcmp.gt.f32.partialorder %v1189, 0.0
    %vm1423 = vcmp.gt.f32.partialorder %v1196, 0.0
    %vm1424 = vcmp.gt.f32.partialorder %v1200, 0.0
    %vm1425 = vcmp.gt.f32.partialorder %v1204, 0.0
    %vm1426 = vcmp.gt.f32.partialorder %v1208, 0.0
    %vm1427 = vcmp.gt.f32.partialorder %v1215, 0.0
    %vm1428 = vcmp.gt.f32.partialorder %v1219, 0.0
    %vm1429 = vcmp.gt.f32.partialorder %v1223, 0.0
    %vm1430 = vcmp.gt.f32.partialorder %v1227, 0.0
    %vm1431 = vcmp.gt.f32.partialorder %v1234, 0.0
    %vm1432 = vcmp.gt.f32.partialorder %v1238, 0.0
    %vm1433 = vcmp.gt.f32.partialorder %v1242, 0.0
    %vm1434 = vcmp.gt.f32.partialorder %v1246, 0.0
    %vm1435 = vcmp.gt.f32.partialorder %v1253, 0.0
    %vm1436 = vcmp.gt.f32.partialorder %v1257, 0.0
    %vm1437 = vcmp.gt.f32.partialorder %v1261, 0.0
    %vm1438 = vcmp.gt.f32.partialorder %v1265, 0.0
    %vm1439 = vcmp.gt.f32.partialorder %v1272, 0.0
    %vm1440 = vcmp.gt.f32.partialorder %v1276, 0.0
    %vm1441 = vcmp.gt.f32.partialorder %v1280, 0.0
    %vm1442 = vcmp.gt.f32.partialorder %v1284, 0.0
    %vm1443 = vcmp.gt.f32.partialorder %v1291, 0.0
    %vm1444 = vcmp.gt.f32.partialorder %v1295, 0.0
    %vm1445 = vcmp.gt.f32.partialorder %v1299, 0.0
    %vm1446 = vcmp.gt.f32.partialorder %v1303, 0.0
    %vm1447 = vcmp.gt.f32.partialorder %v1310, 0.0
    %vm1448 = vcmp.gt.f32.partialorder %v1314, 0.0
    %vm1449 = vcmp.gt.f32.partialorder %v1318, 0.0
    %vm1450 = vcmp.gt.f32.partialorder %v1322, 0.0
    %v1451 = vsel %vm1323, 1, 0
    %v1452 = vsel %vm1324, 1, 0
    %v1453 = vsel %vm1325, 1, 0
    %v1454 = vsel %vm1326, 1, 0
    %v1455 = vsel %vm1327, 1, 0
    %v1456 = vsel %vm1328, 1, 0
    %v1457 = vsel %vm1329, 1, 0
    %v1458 = vsel %vm1330, 1, 0
    %v1459 = vsel %vm1331, 1, 0
    %v1460 = vsel %vm1332, 1, 0
    %v1461 = vsel %vm1333, 1, 0
    %v1462 = vsel %vm1334, 1, 0
    %v1463 = vsel %vm1335, 1, 0
    %v1464 = vsel %vm1336, 1, 0
    %v1465 = vsel %vm1337, 1, 0
    %v1466 = vsel %vm1338, 1, 0
    %v1467 = vsel %vm1339, 1, 0
    %v1468 = vsel %vm1340, 1, 0
    %v1469 = vsel %vm1341, 1, 0
    %v1470 = vsel %vm1342, 1, 0
    %v1471 = vsel %vm1343, 1, 0
    %v1472 = vsel %vm1344, 1, 0
    %v1473 = vsel %vm1345, 1, 0
    %v1474 = vsel %vm1346, 1, 0
    %v1475 = vsel %vm1347, 1, 0
    %v1476 = vsel %vm1348, 1, 0
    %v1477 = vsel %vm1349, 1, 0
    %v1478 = vsel %vm1350, 1, 0
    %v1479 = vsel %vm1351, 1, 0
    %v1480 = vsel %vm1352, 1, 0
    %v1481 = vsel %vm1353, 1, 0
    %v1482 = vsel %vm1354, 1, 0
    %v1483 = vsel %vm1355, 1, 0
    %v1484 = vsel %vm1356, 1, 0
    %v1485 = vsel %vm1357, 1, 0
    %v1486 = vsel %vm1358, 1, 0
    %v1487 = vsel %vm1359, 1, 0
    %v1488 = vsel %vm1360, 1, 0
    %v1489 = vsel %vm1361, 1, 0
    %v1490 = vsel %vm1362, 1, 0
    %v1491 = vsel %vm1363, 1, 0
    %v1492 = vsel %vm1364, 1, 0
    %v1493 = vsel %vm1365, 1, 0
    %v1494 = vsel %vm1366, 1, 0
    %v1495 = vsel %vm1367, 1, 0
    %v1496 = vsel %vm1368, 1, 0
    %v1497 = vsel %vm1369, 1, 0
    %v1498 = vsel %vm1370, 1, 0
    %v1499 = vsel %vm1371, 1, 0
    %v1500 = vsel %vm1372, 1, 0
    %v1501 = vsel %vm1373, 1, 0
    %v1502 = vsel %vm1374, 1, 0
    %v1503 = vsel %vm1375, 1, 0
    %v1504 = vsel %vm1376, 1, 0
    %v1505 = vsel %vm1377, 1, 0
    %v1506 = vsel %vm1378, 1, 0
    %v1507 = vsel %vm1379, 1, 0
    %v1508 = vsel %vm1380, 1, 0
    %v1509 = vsel %vm1381, 1, 0
    %v1510 = vsel %vm1382, 1, 0
    %v1511 = vsel %vm1383, 1, 0
    %v1512 = vsel %vm1384, 1, 0
    %v1513 = vsel %vm1385, 1, 0
    %v1514 = vsel %vm1386, 1, 0
    %v1515 = vsel %vm1387, 1, 0
    %v1516 = vsel %vm1388, 1, 0
    %v1517 = vsel %vm1389, 1, 0
    %v1518 = vsel %vm1390, 1, 0
    %v1519 = vsel %vm1391, 1, 0
    %v1520 = vsel %vm1392, 1, 0
    %v1521 = vsel %vm1393, 1, 0
    %v1522 = vsel %vm1394, 1, 0
    %v1523 = vsel %vm1395, 1, 0
    %v1524 = vsel %vm1396, 1, 0
    %v1525 = vsel %vm1397, 1, 0
    %v1526 = vsel %vm1398, 1, 0
    %v1527 = vsel %vm1399, 1, 0
    %v1528 = vsel %vm1400, 1, 0
    %v1529 = vsel %vm1401, 1, 0
    %v1530 = vsel %vm1402, 1, 0
    %v1531 = vsel %vm1403, 1, 0
    %v1532 = vsel %vm1404, 1, 0
    %v1533 = vsel %vm1405, 1, 0
    %v1534 = vsel %vm1406, 1, 0
    %v1535 = vsel %vm1407, 1, 0
    %v1536 = vsel %vm1408, 1, 0
    %v1537 = vsel %vm1409, 1, 0
    %v1538 = vsel %vm1410, 1, 0
    %v1539 = vsel %vm1411, 1, 0
    %v1540 = vsel %vm1412, 1, 0
    %v1541 = vsel %vm1413, 1, 0
    %v1542 = vsel %vm1414, 1, 0
    %v1543 = vsel %vm1415, 1, 0
    %v1544 = vsel %vm1416, 1, 0
    %v1545 = vsel %vm1417, 1, 0
    %v1546 = vsel %vm1418, 1, 0
    %v1547 = vsel %vm1419, 1, 0
    %v1548 = vsel %vm1420, 1, 0
    %v1549 = vsel %vm1421, 1, 0
    %v1550 = vsel %vm1422, 1, 0
    %v1551 = vsel %vm1423, 1, 0
    %v1552 = vsel %vm1424, 1, 0
    %v1553 = vsel %vm1425, 1, 0
    %v1554 = vsel %vm1426, 1, 0
    %v1555 = vsel %vm1427, 1, 0
    %v1556 = vsel %vm1428, 1, 0
    %v1557 = vsel %vm1429, 1, 0
    %v1558 = vsel %vm1430, 1, 0
    %v1559 = vsel %vm1431, 1, 0
    %v1560 = vsel %vm1432, 1, 0
    %v1561 = vsel %vm1433, 1, 0
    %v1562 = vsel %vm1434, 1, 0
    %v1563 = vsel %vm1435, 1, 0
    %v1564 = vsel %vm1436, 1, 0
    %v1565 = vsel %vm1437, 1, 0
    %v1566 = vsel %vm1438, 1, 0
    %v1567 = vsel %vm1439, 1, 0
    %v1568 = vsel %vm1440, 1, 0
    %v1569 = vsel %vm1441, 1, 0
    %v1570 = vsel %vm1442, 1, 0
    %v1571 = vsel %vm1443, 1, 0
    %v1572 = vsel %vm1444, 1, 0
    %v1573 = vsel %vm1445, 1, 0
    %v1574 = vsel %vm1446, 1, 0
    %v1575 = vsel %vm1447, 1, 0
    %v1576 = vsel %vm1448, 1, 0
    %v1577 = vsel %vm1449, 1, 0
    %v1578 = vsel %vm1450, 1, 0
    %vm1579 = vcmp.eq.s32.totalorder %v1451, 1
    %vm1580 = vcmp.eq.s32.totalorder %v1452, 1
    %vm1581 = vcmp.eq.s32.totalorder %v1453, 1
    %vm1582 = vcmp.eq.s32.totalorder %v1454, 1
    %vm1583 = vcmp.eq.s32.totalorder %v1455, 1
    %vm1584 = vcmp.eq.s32.totalorder %v1456, 1
    %vm1585 = vcmp.eq.s32.totalorder %v1457, 1
    %vm1586 = vcmp.eq.s32.totalorder %v1458, 1
    %vm1587 = vcmp.eq.s32.totalorder %v1459, 1
    %vm1588 = vcmp.eq.s32.totalorder %v1460, 1
    %vm1589 = vcmp.eq.s32.totalorder %v1461, 1
    %vm1590 = vcmp.eq.s32.totalorder %v1462, 1
    %vm1591 = vcmp.eq.s32.totalorder %v1463, 1
    %vm1592 = vcmp.eq.s32.totalorder %v1464, 1
    %vm1593 = vcmp.eq.s32.totalorder %v1465, 1
    %vm1594 = vcmp.eq.s32.totalorder %v1466, 1
    %vm1595 = vcmp.eq.s32.totalorder %v1467, 1
    %vm1596 = vcmp.eq.s32.totalorder %v1468, 1
    %vm1597 = vcmp.eq.s32.totalorder %v1469, 1
    %vm1598 = vcmp.eq.s32.totalorder %v1470, 1
    %vm1599 = vcmp.eq.s32.totalorder %v1471, 1
    %vm1600 = vcmp.eq.s32.totalorder %v1472, 1
    %vm1601 = vcmp.eq.s32.totalorder %v1473, 1
    %vm1602 = vcmp.eq.s32.totalorder %v1474, 1
    %vm1603 = vcmp.eq.s32.totalorder %v1475, 1
    %vm1604 = vcmp.eq.s32.totalorder %v1476, 1
    %vm1605 = vcmp.eq.s32.totalorder %v1477, 1
    %vm1606 = vcmp.eq.s32.totalorder %v1478, 1
    %vm1607 = vcmp.eq.s32.totalorder %v1479, 1
    %vm1608 = vcmp.eq.s32.totalorder %v1480, 1
    %vm1609 = vcmp.eq.s32.totalorder %v1481, 1
    %vm1610 = vcmp.eq.s32.totalorder %v1482, 1
    %vm1611 = vcmp.eq.s32.totalorder %v1483, 1
    %vm1612 = vcmp.eq.s32.totalorder %v1484, 1
    %vm1613 = vcmp.eq.s32.totalorder %v1485, 1
    %vm1614 = vcmp.eq.s32.totalorder %v1486, 1
    %vm1615 = vcmp.eq.s32.totalorder %v1487, 1
    %vm1616 = vcmp.eq.s32.totalorder %v1488, 1
    %vm1617 = vcmp.eq.s32.totalorder %v1489, 1
    %vm1618 = vcmp.eq.s32.totalorder %v1490, 1
    %vm1619 = vcmp.eq.s32.totalorder %v1491, 1
    %vm1620 = vcmp.eq.s32.totalorder %v1492, 1
    %vm1621 = vcmp.eq.s32.totalorder %v1493, 1
    %vm1622 = vcmp.eq.s32.totalorder %v1494, 1
    %vm1623 = vcmp.eq.s32.totalorder %v1495, 1
    %vm1624 = vcmp.eq.s32.totalorder %v1496, 1
    %vm1625 = vcmp.eq.s32.totalorder %v1497, 1
    %vm1626 = vcmp.eq.s32.totalorder %v1498, 1
    %vm1627 = vcmp.eq.s32.totalorder %v1499, 1
    %vm1628 = vcmp.eq.s32.totalorder %v1500, 1
    %vm1629 = vcmp.eq.s32.totalorder %v1501, 1
    %vm1630 = vcmp.eq.s32.totalorder %v1502, 1
    %vm1631 = vcmp.eq.s32.totalorder %v1503, 1
    %vm1632 = vcmp.eq.s32.totalorder %v1504, 1
    %vm1633 = vcmp.eq.s32.totalorder %v1505, 1
    %vm1634 = vcmp.eq.s32.totalorder %v1506, 1
    %vm1635 = vcmp.eq.s32.totalorder %v1507, 1
    %vm1636 = vcmp.eq.s32.totalorder %v1508, 1
    %vm1637 = vcmp.eq.s32.totalorder %v1509, 1
    %vm1638 = vcmp.eq.s32.totalorder %v1510, 1
    %vm1639 = vcmp.eq.s32.totalorder %v1511, 1
    %vm1640 = vcmp.eq.s32.totalorder %v1512, 1
    %vm1641 = vcmp.eq.s32.totalorder %v1513, 1
    %vm1642 = vcmp.eq.s32.totalorder %v1514, 1
    %vm1643 = vcmp.eq.s32.totalorder %v1515, 1
    %vm1644 = vcmp.eq.s32.totalorder %v1516, 1
    %vm1645 = vcmp.eq.s32.totalorder %v1517, 1
    %vm1646 = vcmp.eq.s32.totalorder %v1518, 1
    %vm1647 = vcmp.eq.s32.totalorder %v1519, 1
    %vm1648 = vcmp.eq.s32.totalorder %v1520, 1
    %vm1649 = vcmp.eq.s32.totalorder %v1521, 1
    %vm1650 = vcmp.eq.s32.totalorder %v1522, 1
    %vm1651 = vcmp.eq.s32.totalorder %v1523, 1
    %vm1652 = vcmp.eq.s32.totalorder %v1524, 1
    %vm1653 = vcmp.eq.s32.totalorder %v1525, 1
    %vm1654 = vcmp.eq.s32.totalorder %v1526, 1
    %vm1655 = vcmp.eq.s32.totalorder %v1527, 1
    %vm1656 = vcmp.eq.s32.totalorder %v1528, 1
    %vm1657 = vcmp.eq.s32.totalorder %v1529, 1
    %vm1658 = vcmp.eq.s32.totalorder %v1530, 1
    %vm1659 = vcmp.eq.s32.totalorder %v1531, 1
    %vm1660 = vcmp.eq.s32.totalorder %v1532, 1
    %vm1661 = vcmp.eq.s32.totalorder %v1533, 1
    %vm1662 = vcmp.eq.s32.totalorder %v1534, 1
    %vm1663 = vcmp.eq.s32.totalorder %v1535, 1
    %vm1664 = vcmp.eq.s32.totalorder %v1536, 1
    %vm1665 = vcmp.eq.s32.totalorder %v1537, 1
    %vm1666 = vcmp.eq.s32.totalorder %v1538, 1
    %vm1667 = vcmp.eq.s32.totalorder %v1539, 1
    %vm1668 = vcmp.eq.s32.totalorder %v1540, 1
    %vm1669 = vcmp.eq.s32.totalorder %v1541, 1
    %vm1670 = vcmp.eq.s32.totalorder %v1542, 1
    %vm1671 = vcmp.eq.s32.totalorder %v1543, 1
    %vm1672 = vcmp.eq.s32.totalorder %v1544, 1
    %vm1673 = vcmp.eq.s32.totalorder %v1545, 1
    %vm1674 = vcmp.eq.s32.totalorder %v1546, 1
    %vm1675 = vcmp.eq.s32.totalorder %v1547, 1
    %vm1676 = vcmp.eq.s32.totalorder %v1548, 1
    %vm1677 = vcmp.eq.s32.totalorder %v1549, 1
    %vm1678 = vcmp.eq.s32.totalorder %v1550, 1
    %vm1679 = vcmp.eq.s32.totalorder %v1551, 1
    %vm1680 = vcmp.eq.s32.totalorder %v1552, 1
    %vm1681 = vcmp.eq.s32.totalorder %v1553, 1
    %vm1682 = vcmp.eq.s32.totalorder %v1554, 1
    %vm1683 = vcmp.eq.s32.totalorder %v1555, 1
    %vm1684 = vcmp.eq.s32.totalorder %v1556, 1
    %vm1685 = vcmp.eq.s32.totalorder %v1557, 1
    %vm1686 = vcmp.eq.s32.totalorder %v1558, 1
    %vm1687 = vcmp.eq.s32.totalorder %v1559, 1
    %vm1688 = vcmp.eq.s32.totalorder %v1560, 1
    %vm1689 = vcmp.eq.s32.totalorder %v1561, 1
    %vm1690 = vcmp.eq.s32.totalorder %v1562, 1
    %vm1691 = vcmp.eq.s32.totalorder %v1563, 1
    %vm1692 = vcmp.eq.s32.totalorder %v1564, 1
    %vm1693 = vcmp.eq.s32.totalorder %v1565, 1
    %vm1694 = vcmp.eq.s32.totalorder %v1566, 1
    %vm1695 = vcmp.eq.s32.totalorder %v1567, 1
    %vm1696 = vcmp.eq.s32.totalorder %v1568, 1
    %vm1697 = vcmp.eq.s32.totalorder %v1569, 1
    %vm1698 = vcmp.eq.s32.totalorder %v1570, 1
    %vm1699 = vcmp.eq.s32.totalorder %v1571, 1
    %vm1700 = vcmp.eq.s32.totalorder %v1572, 1
    %vm1701 = vcmp.eq.s32.totalorder %v1573, 1
    %vm1702 = vcmp.eq.s32.totalorder %v1574, 1
    %vm1703 = vcmp.eq.s32.totalorder %v1575, 1
    %vm1704 = vcmp.eq.s32.totalorder %v1576, 1
    %vm1705 = vcmp.eq.s32.totalorder %v1577, 1
    %vm1706 = vcmp.eq.s32.totalorder %v1578, 1
    %v1707 = vsel %vm1579, %v118, -1e+30
    %v1708 = vsel %vm1580, %v121, -1e+30
    %v1709 = vsel %vm1581, %v126, -1e+30
    %v1710 = vsel %vm1582, %v129, -1e+30
    %v1711 = vsel %vm1583, %v118, -1e+30
    %v1712 = vsel %vm1584, %v121, -1e+30
    %v1713 = vsel %vm1585, %v126, -1e+30
    %v1714 = vsel %vm1586, %v129, -1e+30
    %v1715 = vsel %vm1587, %v118, -1e+30
    %v1716 = vsel %vm1588, %v121, -1e+30
    %v1717 = vsel %vm1589, %v126, -1e+30
    %v1718 = vsel %vm1590, %v129, -1e+30
    %v1719 = vsel %vm1591, %v118, -1e+30
    %v1720 = vsel %vm1592, %v121, -1e+30
    %v1721 = vsel %vm1593, %v126, -1e+30
    %v1722 = vsel %vm1594, %v129, -1e+30
    %v1723 = vsel %vm1595, %v118, -1e+30
    %v1724 = vsel %vm1596, %v121, -1e+30
    %v1725 = vsel %vm1597, %v126, -1e+30
    %v1726 = vsel %vm1598, %v129, -1e+30
    %v1727 = vsel %vm1599, %v118, -1e+30
    %v1728 = vsel %vm1600, %v121, -1e+30
    %v1729 = vsel %vm1601, %v126, -1e+30
    %v1730 = vsel %vm1602, %v129, -1e+30
    %v1731 = vsel %vm1603, %v118, -1e+30
    %v1732 = vsel %vm1604, %v121, -1e+30
    %v1733 = vsel %vm1605, %v126, -1e+30
    %v1734 = vsel %vm1606, %v129, -1e+30
    %v1735 = vsel %vm1607, %v118, -1e+30
    %v1736 = vsel %vm1608, %v121, -1e+30
    %v1737 = vsel %vm1609, %v126, -1e+30
    %v1738 = vsel %vm1610, %v129, -1e+30
    %v1739 = vsel %vm1611, %v118, -1e+30
    %v1740 = vsel %vm1612, %v121, -1e+30
    %v1741 = vsel %vm1613, %v126, -1e+30
    %v1742 = vsel %vm1614, %v129, -1e+30
    %v1743 = vsel %vm1615, %v118, -1e+30
    %v1744 = vsel %vm1616, %v121, -1e+30
    %v1745 = vsel %vm1617, %v126, -1e+30
    %v1746 = vsel %vm1618, %v129, -1e+30
    %v1747 = vsel %vm1619, %v118, -1e+30
    %v1748 = vsel %vm1620, %v121, -1e+30
    %v1749 = vsel %vm1621, %v126, -1e+30
    %v1750 = vsel %vm1622, %v129, -1e+30
    %v1751 = vsel %vm1623, %v118, -1e+30
    %v1752 = vsel %vm1624, %v121, -1e+30
    %v1753 = vsel %vm1625, %v126, -1e+30
    %v1754 = vsel %vm1626, %v129, -1e+30
    %v1755 = vsel %vm1627, %v118, -1e+30
    %v1756 = vsel %vm1628, %v121, -1e+30
    %v1757 = vsel %vm1629, %v126, -1e+30
    %v1758 = vsel %vm1630, %v129, -1e+30
    %v1759 = vsel %vm1631, %v118, -1e+30
    %v1760 = vsel %vm1632, %v121, -1e+30
    %v1761 = vsel %vm1633, %v126, -1e+30
    %v1762 = vsel %vm1634, %v129, -1e+30
    %v1763 = vsel %vm1635, %v118, -1e+30
    %v1764 = vsel %vm1636, %v121, -1e+30
    %v1765 = vsel %vm1637, %v126, -1e+30
    %v1766 = vsel %vm1638, %v129, -1e+30
    %v1767 = vsel %vm1639, %v118, -1e+30
    %v1768 = vsel %vm1640, %v121, -1e+30
    %v1769 = vsel %vm1641, %v126, -1e+30
    %v1770 = vsel %vm1642, %v129, -1e+30
    %v1771 = vsel %vm1643, %v118, -1e+30
    %v1772 = vsel %vm1644, %v121, -1e+30
    %v1773 = vsel %vm1645, %v126, -1e+30
    %v1774 = vsel %vm1646, %v129, -1e+30
    %v1775 = vsel %vm1647, %v118, -1e+30
    %v1776 = vsel %vm1648, %v121, -1e+30
    %v1777 = vsel %vm1649, %v126, -1e+30
    %v1778 = vsel %vm1650, %v129, -1e+30
    %v1779 = vsel %vm1651, %v118, -1e+30
    %v1780 = vsel %vm1652, %v121, -1e+30
    %v1781 = vsel %vm1653, %v126, -1e+30
    %v1782 = vsel %vm1654, %v129, -1e+30
    %v1783 = vsel %vm1655, %v118, -1e+30
    %v1784 = vsel %vm1656, %v121, -1e+30
    %v1785 = vsel %vm1657, %v126, -1e+30
    %v1786 = vsel %vm1658, %v129, -1e+30
    %v1787 = vsel %vm1659, %v118, -1e+30
    %v1788 = vsel %vm1660, %v121, -1e+30
    %v1789 = vsel %vm1661, %v126, -1e+30
    %v1790 = vsel %vm1662, %v129, -1e+30
    %v1791 = vsel %vm1663, %v118, -1e+30
    %v1792 = vsel %vm1664, %v121, -1e+30
    %v1793 = vsel %vm1665, %v126, -1e+30
    %v1794 = vsel %vm1666, %v129, -1e+30
    %v1795 = vsel %vm1667, %v118, -1e+30
    %v1796 = vsel %vm1668, %v121, -1e+30
    %v1797 = vsel %vm1669, %v126, -1e+30
    %v1798 = vsel %vm1670, %v129, -1e+30
    %v1799 = vsel %vm1671, %v118, -1e+30
    %v1800 = vsel %vm1672, %v121, -1e+30
    %v1801 = vsel %vm1673, %v126, -1e+30
    %v1802 = vsel %vm1674, %v129, -1e+30
    %v1803 = vsel %vm1675, %v118, -1e+30
    %v1804 = vsel %vm1676, %v121, -1e+30
    %v1805 = vsel %vm1677, %v126, -1e+30
    %v1806 = vsel %vm1678, %v129, -1e+30
    %v1807 = vsel %vm1679, %v118, -1e+30
    %v1808 = vsel %vm1680, %v121, -1e+30
    %v1809 = vsel %vm1681, %v126, -1e+30
    %v1810 = vsel %vm1682, %v129, -1e+30
    %v1811 = vsel %vm1683, %v118, -1e+30
    %v1812 = vsel %vm1684, %v121, -1e+30
    %v1813 = vsel %vm1685, %v126, -1e+30
    %v1814 = vsel %vm1686, %v129, -1e+30
    %v1815 = vsel %vm1687, %v118, -1e+30
    %v1816 = vsel %vm1688, %v121, -1e+30
    %v1817 = vsel %vm1689, %v126, -1e+30
    %v1818 = vsel %vm1690, %v129, -1e+30
    %v1819 = vsel %vm1691, %v118, -1e+30
    %v1820 = vsel %vm1692, %v121, -1e+30
    %v1821 = vsel %vm1693, %v126, -1e+30
    %v1822 = vsel %vm1694, %v129, -1e+30
    %v1823 = vsel %vm1695, %v118, -1e+30
    %v1824 = vsel %vm1696, %v121, -1e+30
    %v1825 = vsel %vm1697, %v126, -1e+30
    %v1826 = vsel %vm1698, %v129, -1e+30
    %v1827 = vsel %vm1699, %v118, -1e+30
    %v1828 = vsel %vm1700, %v121, -1e+30
    %v1829 = vsel %vm1701, %v126, -1e+30
    %v1830 = vsel %vm1702, %v129, -1e+30
    %v1831 = vsel %vm1703, %v118, -1e+30
    %v1832 = vsel %vm1704, %v121, -1e+30
    %v1833 = vsel %vm1705, %v126, -1e+30
    %v1834 = vsel %vm1706, %v129, -1e+30
    %vm1835 = vcmask 785920
    %v1836 = vsel %vm1835, %v1707, -inf
    %v1837 = vsel %vm1835, %v1708, -inf
    %v1838 = vmax.f32 %v1836, %v1837
    %v1839 = vsel %vm1835, %v1709, -inf
    %v1840 = vmax.f32 %v1838, %v1839
    %v1841 = vsel %vm1835, %v1710, -inf
    %v1842 = vmax.f32 %v1840, %v1841
    %v1843 = vrot.slane %v1842, 4
    %v1844 = vmax.f32 %v1842, %v1843
    %v1845 = vrot.slane %v1844, 2
    %v1846 = vmax.f32 %v1844, %v1845
    %v1847 = vrot.slane %v1846, 1
    %v1848 = vmax.f32 %v1846, %v1847
    %v1849 = vsel %vm1835, %v1711, -inf
    %v1850 = vsel %vm1835, %v1712, -inf
    %v1851 = vmax.f32 %v1849, %v1850
    %v1852 = vsel %vm1835, %v1713, -inf
    %v1853 = vmax.f32 %v1851, %v1852
    %v1854 = vsel %vm1835, %v1714, -inf
    %v1855 = vmax.f32 %v1853, %v1854
    %v1856 = vrot.slane %v1855, 4
    %v1857 = vmax.f32 %v1855, %v1856
    %v1858 = vrot.slane %v1857, 2
    %v1859 = vmax.f32 %v1857, %v1858
    %v1860 = vrot.slane %v1859, 1
    %v1861 = vmax.f32 %v1859, %v1860
    %v1862 = vsel %vm1835, %v1715, -inf
    %v1863 = vsel %vm1835, %v1716, -inf
    %v1864 = vmax.f32 %v1862, %v1863
    %v1865 = vsel %vm1835, %v1717, -inf
    %v1866 = vmax.f32 %v1864, %v1865
    %v1867 = vsel %vm1835, %v1718, -inf
    %v1868 = vmax.f32 %v1866, %v1867
    %v1869 = vrot.slane %v1868, 4
    %v1870 = vmax.f32 %v1868, %v1869
    %v1871 = vrot.slane %v1870, 2
    %v1872 = vmax.f32 %v1870, %v1871
    %v1873 = vrot.slane %v1872, 1
    %v1874 = vmax.f32 %v1872, %v1873
    %v1875 = vsel %vm1835, %v1719, -inf
    %v1876 = vsel %vm1835, %v1720, -inf
    %v1877 = vmax.f32 %v1875, %v1876
    %v1878 = vsel %vm1835, %v1721, -inf
    %v1879 = vmax.f32 %v1877, %v1878
    %v1880 = vsel %vm1835, %v1722, -inf
    %v1881 = vmax.f32 %v1879, %v1880
    %v1882 = vrot.slane %v1881, 4
    %v1883 = vmax.f32 %v1881, %v1882
    %v1884 = vrot.slane %v1883, 2
    %v1885 = vmax.f32 %v1883, %v1884
    %v1886 = vrot.slane %v1885, 1
    %v1887 = vmax.f32 %v1885, %v1886
    %v1888 = vsel %vm1835, %v1723, -inf
    %v1889 = vsel %vm1835, %v1724, -inf
    %v1890 = vmax.f32 %v1888, %v1889
    %v1891 = vsel %vm1835, %v1725, -inf
    %v1892 = vmax.f32 %v1890, %v1891
    %v1893 = vsel %vm1835, %v1726, -inf
    %v1894 = vmax.f32 %v1892, %v1893
    %v1895 = vrot.slane %v1894, 4
    %v1896 = vmax.f32 %v1894, %v1895
    %v1897 = vrot.slane %v1896, 2
    %v1898 = vmax.f32 %v1896, %v1897
    %v1899 = vrot.slane %v1898, 1
    %v1900 = vmax.f32 %v1898, %v1899
    %v1901 = vsel %vm1835, %v1727, -inf
    %v1902 = vsel %vm1835, %v1728, -inf
    %v1903 = vmax.f32 %v1901, %v1902
    %v1904 = vsel %vm1835, %v1729, -inf
    %v1905 = vmax.f32 %v1903, %v1904
    %v1906 = vsel %vm1835, %v1730, -inf
    %v1907 = vmax.f32 %v1905, %v1906
    %v1908 = vrot.slane %v1907, 4
    %v1909 = vmax.f32 %v1907, %v1908
    %v1910 = vrot.slane %v1909, 2
    %v1911 = vmax.f32 %v1909, %v1910
    %v1912 = vrot.slane %v1911, 1
    %v1913 = vmax.f32 %v1911, %v1912
    %v1914 = vsel %vm1835, %v1731, -inf
    %v1915 = vsel %vm1835, %v1732, -inf
    %v1916 = vmax.f32 %v1914, %v1915
    %v1917 = vsel %vm1835, %v1733, -inf
    %v1918 = vmax.f32 %v1916, %v1917
    %v1919 = vsel %vm1835, %v1734, -inf
    %v1920 = vmax.f32 %v1918, %v1919
    %v1921 = vrot.slane %v1920, 4
    %v1922 = vmax.f32 %v1920, %v1921
    %v1923 = vrot.slane %v1922, 2
    %v1924 = vmax.f32 %v1922, %v1923
    %v1925 = vrot.slane %v1924, 1
    %v1926 = vmax.f32 %v1924, %v1925
    %v1927 = vsel %vm1835, %v1735, -inf
    %v1928 = vsel %vm1835, %v1736, -inf
    %v1929 = vmax.f32 %v1927, %v1928
    %v1930 = vsel %vm1835, %v1737, -inf
    %v1931 = vmax.f32 %v1929, %v1930
    %v1932 = vsel %vm1835, %v1738, -inf
    %v1933 = vmax.f32 %v1931, %v1932
    %v1934 = vrot.slane %v1933, 4
    %v1935 = vmax.f32 %v1933, %v1934
    %v1936 = vrot.slane %v1935, 2
    %v1937 = vmax.f32 %v1935, %v1936
    %v1938 = vrot.slane %v1937, 1
    %v1939 = vmax.f32 %v1937, %v1938
    %v1940 = vsel %vm1835, %v1739, -inf
    %v1941 = vsel %vm1835, %v1740, -inf
    %v1942 = vmax.f32 %v1940, %v1941
    %v1943 = vsel %vm1835, %v1741, -inf
    %v1944 = vmax.f32 %v1942, %v1943
    %v1945 = vsel %vm1835, %v1742, -inf
    %v1946 = vmax.f32 %v1944, %v1945
    %v1947 = vrot.slane %v1946, 4
    %v1948 = vmax.f32 %v1946, %v1947
    %v1949 = vrot.slane %v1948, 2
    %v1950 = vmax.f32 %v1948, %v1949
    %v1951 = vrot.slane %v1950, 1
    %v1952 = vmax.f32 %v1950, %v1951
    %v1953 = vsel %vm1835, %v1743, -inf
    %v1954 = vsel %vm1835, %v1744, -inf
    %v1955 = vmax.f32 %v1953, %v1954
    %v1956 = vsel %vm1835, %v1745, -inf
    %v1957 = vmax.f32 %v1955, %v1956
    %v1958 = vsel %vm1835, %v1746, -inf
    %v1959 = vmax.f32 %v1957, %v1958
    %v1960 = vrot.slane %v1959, 4
    %v1961 = vmax.f32 %v1959, %v1960
    %v1962 = vrot.slane %v1961, 2
    %v1963 = vmax.f32 %v1961, %v1962
    %v1964 = vrot.slane %v1963, 1
    %v1965 = vmax.f32 %v1963, %v1964
    %v1966 = vsel %vm1835, %v1747, -inf
    %v1967 = vsel %vm1835, %v1748, -inf
    %v1968 = vmax.f32 %v1966, %v1967
    %v1969 = vsel %vm1835, %v1749, -inf
    %v1970 = vmax.f32 %v1968, %v1969
    %v1971 = vsel %vm1835, %v1750, -inf
    %v1972 = vmax.f32 %v1970, %v1971
    %v1973 = vrot.slane %v1972, 4
    %v1974 = vmax.f32 %v1972, %v1973
    %v1975 = vrot.slane %v1974, 2
    %v1976 = vmax.f32 %v1974, %v1975
    %v1977 = vrot.slane %v1976, 1
    %v1978 = vmax.f32 %v1976, %v1977
    %v1979 = vsel %vm1835, %v1751, -inf
    %v1980 = vsel %vm1835, %v1752, -inf
    %v1981 = vmax.f32 %v1979, %v1980
    %v1982 = vsel %vm1835, %v1753, -inf
    %v1983 = vmax.f32 %v1981, %v1982
    %v1984 = vsel %vm1835, %v1754, -inf
    %v1985 = vmax.f32 %v1983, %v1984
    %v1986 = vrot.slane %v1985, 4
    %v1987 = vmax.f32 %v1985, %v1986
    %v1988 = vrot.slane %v1987, 2
    %v1989 = vmax.f32 %v1987, %v1988
    %v1990 = vrot.slane %v1989, 1
    %v1991 = vmax.f32 %v1989, %v1990
    %v1992 = vsel %vm1835, %v1755, -inf
    %v1993 = vsel %vm1835, %v1756, -inf
    %v1994 = vmax.f32 %v1992, %v1993
    %v1995 = vsel %vm1835, %v1757, -inf
    %v1996 = vmax.f32 %v1994, %v1995
    %v1997 = vsel %vm1835, %v1758, -inf
    %v1998 = vmax.f32 %v1996, %v1997
    %v1999 = vrot.slane %v1998, 4
    %v2000 = vmax.f32 %v1998, %v1999
    %v2001 = vrot.slane %v2000, 2
    %v2002 = vmax.f32 %v2000, %v2001
    %v2003 = vrot.slane %v2002, 1
    %v2004 = vmax.f32 %v2002, %v2003
    %v2005 = vsel %vm1835, %v1759, -inf
    %v2006 = vsel %vm1835, %v1760, -inf
    %v2007 = vmax.f32 %v2005, %v2006
    %v2008 = vsel %vm1835, %v1761, -inf
    %v2009 = vmax.f32 %v2007, %v2008
    %v2010 = vsel %vm1835, %v1762, -inf
    %v2011 = vmax.f32 %v2009, %v2010
    %v2012 = vrot.slane %v2011, 4
    %v2013 = vmax.f32 %v2011, %v2012
    %v2014 = vrot.slane %v2013, 2
    %v2015 = vmax.f32 %v2013, %v2014
    %v2016 = vrot.slane %v2015, 1
    %v2017 = vmax.f32 %v2015, %v2016
    %v2018 = vsel %vm1835, %v1763, -inf
    %v2019 = vsel %vm1835, %v1764, -inf
    %v2020 = vmax.f32 %v2018, %v2019
    %v2021 = vsel %vm1835, %v1765, -inf
    %v2022 = vmax.f32 %v2020, %v2021
    %v2023 = vsel %vm1835, %v1766, -inf
    %v2024 = vmax.f32 %v2022, %v2023
    %v2025 = vrot.slane %v2024, 4
    %v2026 = vmax.f32 %v2024, %v2025
    %v2027 = vrot.slane %v2026, 2
    %v2028 = vmax.f32 %v2026, %v2027
    %v2029 = vrot.slane %v2028, 1
    %v2030 = vmax.f32 %v2028, %v2029
    %v2031 = vsel %vm1835, %v1767, -inf
    %v2032 = vsel %vm1835, %v1768, -inf
    %v2033 = vmax.f32 %v2031, %v2032
    %v2034 = vsel %vm1835, %v1769, -inf
    %v2035 = vmax.f32 %v2033, %v2034
    %v2036 = vsel %vm1835, %v1770, -inf
    %v2037 = vmax.f32 %v2035, %v2036
    %v2038 = vrot.slane %v2037, 4
    %v2039 = vmax.f32 %v2037, %v2038
    %v2040 = vrot.slane %v2039, 2
    %v2041 = vmax.f32 %v2039, %v2040
    %v2042 = vrot.slane %v2041, 1
    %v2043 = vmax.f32 %v2041, %v2042
    %v2044 = vsel %vm1835, %v1771, -inf
    %v2045 = vsel %vm1835, %v1772, -inf
    %v2046 = vmax.f32 %v2044, %v2045
    %v2047 = vsel %vm1835, %v1773, -inf
    %v2048 = vmax.f32 %v2046, %v2047
    %v2049 = vsel %vm1835, %v1774, -inf
    %v2050 = vmax.f32 %v2048, %v2049
    %v2051 = vrot.slane %v2050, 4
    %v2052 = vmax.f32 %v2050, %v2051
    %v2053 = vrot.slane %v2052, 2
    %v2054 = vmax.f32 %v2052, %v2053
    %v2055 = vrot.slane %v2054, 1
    %v2056 = vmax.f32 %v2054, %v2055
    %v2057 = vsel %vm1835, %v1775, -inf
    %v2058 = vsel %vm1835, %v1776, -inf
    %v2059 = vmax.f32 %v2057, %v2058
    %v2060 = vsel %vm1835, %v1777, -inf
    %v2061 = vmax.f32 %v2059, %v2060
    %v2062 = vsel %vm1835, %v1778, -inf
    %v2063 = vmax.f32 %v2061, %v2062
    %v2064 = vrot.slane %v2063, 4
    %v2065 = vmax.f32 %v2063, %v2064
    %v2066 = vrot.slane %v2065, 2
    %v2067 = vmax.f32 %v2065, %v2066
    %v2068 = vrot.slane %v2067, 1
    %v2069 = vmax.f32 %v2067, %v2068
    %v2070 = vsel %vm1835, %v1779, -inf
    %v2071 = vsel %vm1835, %v1780, -inf
    %v2072 = vmax.f32 %v2070, %v2071
    %v2073 = vsel %vm1835, %v1781, -inf
    %v2074 = vmax.f32 %v2072, %v2073
    %v2075 = vsel %vm1835, %v1782, -inf
    %v2076 = vmax.f32 %v2074, %v2075
    %v2077 = vrot.slane %v2076, 4
    %v2078 = vmax.f32 %v2076, %v2077
    %v2079 = vrot.slane %v2078, 2
    %v2080 = vmax.f32 %v2078, %v2079
    %v2081 = vrot.slane %v2080, 1
    %v2082 = vmax.f32 %v2080, %v2081
    %v2083 = vsel %vm1835, %v1783, -inf
    %v2084 = vsel %vm1835, %v1784, -inf
    %v2085 = vmax.f32 %v2083, %v2084
    %v2086 = vsel %vm1835, %v1785, -inf
    %v2087 = vmax.f32 %v2085, %v2086
    %v2088 = vsel %vm1835, %v1786, -inf
    %v2089 = vmax.f32 %v2087, %v2088
    %v2090 = vrot.slane %v2089, 4
    %v2091 = vmax.f32 %v2089, %v2090
    %v2092 = vrot.slane %v2091, 2
    %v2093 = vmax.f32 %v2091, %v2092
    %v2094 = vrot.slane %v2093, 1
    %v2095 = vmax.f32 %v2093, %v2094
    %v2096 = vsel %vm1835, %v1787, -inf
    %v2097 = vsel %vm1835, %v1788, -inf
    %v2098 = vmax.f32 %v2096, %v2097
    %v2099 = vsel %vm1835, %v1789, -inf
    %v2100 = vmax.f32 %v2098, %v2099
    %v2101 = vsel %vm1835, %v1790, -inf
    %v2102 = vmax.f32 %v2100, %v2101
    %v2103 = vrot.slane %v2102, 4
    %v2104 = vmax.f32 %v2102, %v2103
    %v2105 = vrot.slane %v2104, 2
    %v2106 = vmax.f32 %v2104, %v2105
    %v2107 = vrot.slane %v2106, 1
    %v2108 = vmax.f32 %v2106, %v2107
    %v2109 = vsel %vm1835, %v1791, -inf
    %v2110 = vsel %vm1835, %v1792, -inf
    %v2111 = vmax.f32 %v2109, %v2110
    %v2112 = vsel %vm1835, %v1793, -inf
    %v2113 = vmax.f32 %v2111, %v2112
    %v2114 = vsel %vm1835, %v1794, -inf
    %v2115 = vmax.f32 %v2113, %v2114
    %v2116 = vrot.slane %v2115, 4
    %v2117 = vmax.f32 %v2115, %v2116
    %v2118 = vrot.slane %v2117, 2
    %v2119 = vmax.f32 %v2117, %v2118
    %v2120 = vrot.slane %v2119, 1
    %v2121 = vmax.f32 %v2119, %v2120
    %v2122 = vsel %vm1835, %v1795, -inf
    %v2123 = vsel %vm1835, %v1796, -inf
    %v2124 = vmax.f32 %v2122, %v2123
    %v2125 = vsel %vm1835, %v1797, -inf
    %v2126 = vmax.f32 %v2124, %v2125
    %v2127 = vsel %vm1835, %v1798, -inf
    %v2128 = vmax.f32 %v2126, %v2127
    %v2129 = vrot.slane %v2128, 4
    %v2130 = vmax.f32 %v2128, %v2129
    %v2131 = vrot.slane %v2130, 2
    %v2132 = vmax.f32 %v2130, %v2131
    %v2133 = vrot.slane %v2132, 1
    %v2134 = vmax.f32 %v2132, %v2133
    %v2135 = vsel %vm1835, %v1799, -inf
    %v2136 = vsel %vm1835, %v1800, -inf
    %v2137 = vmax.f32 %v2135, %v2136
    %v2138 = vsel %vm1835, %v1801, -inf
    %v2139 = vmax.f32 %v2137, %v2138
    %v2140 = vsel %vm1835, %v1802, -inf
    %v2141 = vmax.f32 %v2139, %v2140
    %v2142 = vrot.slane %v2141, 4
    %v2143 = vmax.f32 %v2141, %v2142
    %v2144 = vrot.slane %v2143, 2
    %v2145 = vmax.f32 %v2143, %v2144
    %v2146 = vrot.slane %v2145, 1
    %v2147 = vmax.f32 %v2145, %v2146
    %v2148 = vsel %vm1835, %v1803, -inf
    %v2149 = vsel %vm1835, %v1804, -inf
    %v2150 = vmax.f32 %v2148, %v2149
    %v2151 = vsel %vm1835, %v1805, -inf
    %v2152 = vmax.f32 %v2150, %v2151
    %v2153 = vsel %vm1835, %v1806, -inf
    %v2154 = vmax.f32 %v2152, %v2153
    %v2155 = vrot.slane %v2154, 4
    %v2156 = vmax.f32 %v2154, %v2155
    %v2157 = vrot.slane %v2156, 2
    %v2158 = vmax.f32 %v2156, %v2157
    %v2159 = vrot.slane %v2158, 1
    %v2160 = vmax.f32 %v2158, %v2159
    %v2161 = vsel %vm1835, %v1807, -inf
    %v2162 = vsel %vm1835, %v1808, -inf
    %v2163 = vmax.f32 %v2161, %v2162
    %v2164 = vsel %vm1835, %v1809, -inf
    %v2165 = vmax.f32 %v2163, %v2164
    %v2166 = vsel %vm1835, %v1810, -inf
    %v2167 = vmax.f32 %v2165, %v2166
    %v2168 = vrot.slane %v2167, 4
    %v2169 = vmax.f32 %v2167, %v2168
    %v2170 = vrot.slane %v2169, 2
    %v2171 = vmax.f32 %v2169, %v2170
    %v2172 = vrot.slane %v2171, 1
    %v2173 = vmax.f32 %v2171, %v2172
    %v2174 = vsel %vm1835, %v1811, -inf
    %v2175 = vsel %vm1835, %v1812, -inf
    %v2176 = vmax.f32 %v2174, %v2175
    %v2177 = vsel %vm1835, %v1813, -inf
    %v2178 = vmax.f32 %v2176, %v2177
    %v2179 = vsel %vm1835, %v1814, -inf
    %v2180 = vmax.f32 %v2178, %v2179
    %v2181 = vrot.slane %v2180, 4
    %v2182 = vmax.f32 %v2180, %v2181
    %v2183 = vrot.slane %v2182, 2
    %v2184 = vmax.f32 %v2182, %v2183
    %v2185 = vrot.slane %v2184, 1
    %v2186 = vmax.f32 %v2184, %v2185
    %v2187 = vsel %vm1835, %v1815, -inf
    %v2188 = vsel %vm1835, %v1816, -inf
    %v2189 = vmax.f32 %v2187, %v2188
    %v2190 = vsel %vm1835, %v1817, -inf
    %v2191 = vmax.f32 %v2189, %v2190
    %v2192 = vsel %vm1835, %v1818, -inf
    %v2193 = vmax.f32 %v2191, %v2192
    %v2194 = vrot.slane %v2193, 4
    %v2195 = vmax.f32 %v2193, %v2194
    %v2196 = vrot.slane %v2195, 2
    %v2197 = vmax.f32 %v2195, %v2196
    %v2198 = vrot.slane %v2197, 1
    %v2199 = vmax.f32 %v2197, %v2198
    %v2200 = vsel %vm1835, %v1819, -inf
    %v2201 = vsel %vm1835, %v1820, -inf
    %v2202 = vmax.f32 %v2200, %v2201
    %v2203 = vsel %vm1835, %v1821, -inf
    %v2204 = vmax.f32 %v2202, %v2203
    %v2205 = vsel %vm1835, %v1822, -inf
    %v2206 = vmax.f32 %v2204, %v2205
    %v2207 = vrot.slane %v2206, 4
    %v2208 = vmax.f32 %v2206, %v2207
    %v2209 = vrot.slane %v2208, 2
    %v2210 = vmax.f32 %v2208, %v2209
    %v2211 = vrot.slane %v2210, 1
    %v2212 = vmax.f32 %v2210, %v2211
    %v2213 = vsel %vm1835, %v1823, -inf
    %v2214 = vsel %vm1835, %v1824, -inf
    %v2215 = vmax.f32 %v2213, %v2214
    %v2216 = vsel %vm1835, %v1825, -inf
    %v2217 = vmax.f32 %v2215, %v2216
    %v2218 = vsel %vm1835, %v1826, -inf
    %v2219 = vmax.f32 %v2217, %v2218
    %v2220 = vrot.slane %v2219, 4
    %v2221 = vmax.f32 %v2219, %v2220
    %v2222 = vrot.slane %v2221, 2
    %v2223 = vmax.f32 %v2221, %v2222
    %v2224 = vrot.slane %v2223, 1
    %v2225 = vmax.f32 %v2223, %v2224
    %v2226 = vsel %vm1835, %v1827, -inf
    %v2227 = vsel %vm1835, %v1828, -inf
    %v2228 = vmax.f32 %v2226, %v2227
    %v2229 = vsel %vm1835, %v1829, -inf
    %v2230 = vmax.f32 %v2228, %v2229
    %v2231 = vsel %vm1835, %v1830, -inf
    %v2232 = vmax.f32 %v2230, %v2231
    %v2233 = vrot.slane %v2232, 4
    %v2234 = vmax.f32 %v2232, %v2233
    %v2235 = vrot.slane %v2234, 2
    %v2236 = vmax.f32 %v2234, %v2235
    %v2237 = vrot.slane %v2236, 1
    %v2238 = vmax.f32 %v2236, %v2237
    %v2239 = vsel %vm1835, %v1831, -inf
    %v2240 = vsel %vm1835, %v1832, -inf
    %v2241 = vmax.f32 %v2239, %v2240
    %v2242 = vsel %vm1835, %v1833, -inf
    %v2243 = vmax.f32 %v2241, %v2242
    %v2244 = vsel %vm1835, %v1834, -inf
    %v2245 = vmax.f32 %v2243, %v2244
    %v2246 = vrot.slane %v2245, 4
    %v2247 = vmax.f32 %v2245, %v2246
    %v2248 = vrot.slane %v2247, 2
    %v2249 = vmax.f32 %v2247, %v2248
    %v2250 = vrot.slane %v2249, 1
    %v2251 = vmax.f32 %v2249, %v2250
    %vm2252 = vcmp.gt.f32.partialorder %v60, 0.0
    %vm2253 = vcmp.gt.f32.partialorder %v61, 0.0
    %vm2254 = vcmp.gt.f32.partialorder %v62, 0.0
    %vm2255 = vcmp.gt.f32.partialorder %v63, 0.0
    %v2260 = vrot.slane %v118, 1
    %v2261 = vrot.slane %v118, 2
    %v2262 = vrot.slane %v118, 3
    %v2263 = vrot.slane %v118, 4
    %v2264 = vrot.slane %v118, 5
    %v2265 = vrot.slane %v118, 6
    %v2266 = vrot.slane %v118, 7
    %v2267 = vrot.slane %v121, 1
    %v2268 = vrot.slane %v121, 2
    %v2269 = vrot.slane %v121, 3
    %v2270 = vrot.slane %v121, 4
    %v2271 = vrot.slane %v121, 5
    %v2272 = vrot.slane %v121, 6
    %v2273 = vrot.slane %v121, 7
    %v2274 = vrot.slane %v126, 1
    %v2275 = vrot.slane %v126, 2
    %v2276 = vrot.slane %v126, 3
    %v2277 = vrot.slane %v126, 4
    %v2278 = vrot.slane %v126, 5
    %v2279 = vrot.slane %v126, 6
    %v2280 = vrot.slane %v126, 7
    %v2281 = vrot.slane %v129, 1
    %v2282 = vrot.slane %v129, 2
    %v2283 = vrot.slane %v129, 3
    %v2284 = vrot.slane %v129, 4
    %v2285 = vrot.slane %v129, 5
    %v2286 = vrot.slane %v129, 6
    %v2287 = vrot.slane %v129, 7
    %2288 = vrot.lane.b32.xlu0 %v118, 96
    %v2289 = vpop.permute.xlu0 %2288
    %2290 = vrot.lane.b32.xlu0 %v2260, 96
    %v2291 = vpop.permute.xlu0 %2290
    %2292 = vrot.lane.b32.xlu0 %v2261, 96
    %v2293 = vpop.permute.xlu0 %2292
    %2294 = vrot.lane.b32.xlu0 %v2262, 96
    %v2295 = vpop.permute.xlu0 %2294
    %2296 = vrot.lane.b32.xlu0 %v2263, 96
    %v2297 = vpop.permute.xlu0 %2296
    %2298 = vrot.lane.b32.xlu0 %v2264, 96
    %v2299 = vpop.permute.xlu0 %2298
    %2300 = vrot.lane.b32.xlu0 %v2265, 96
    %v2301 = vpop.permute.xlu0 %2300
    %2302 = vrot.lane.b32.xlu0 %v2266, 96
    %v2303 = vpop.permute.xlu0 %2302
    %2304 = vrot.lane.b32.xlu0 %v121, 96
    %v2305 = vpop.permute.xlu0 %2304
    %2306 = vrot.lane.b32.xlu0 %v2267, 96
    %v2307 = vpop.permute.xlu0 %2306
    %2308 = vrot.lane.b32.xlu0 %v2268, 96
    %v2309 = vpop.permute.xlu0 %2308
    %2310 = vrot.lane.b32.xlu0 %v2269, 96
    %v2311 = vpop.permute.xlu0 %2310
    %2312 = vrot.lane.b32.xlu0 %v2270, 96
    %v2313 = vpop.permute.xlu0 %2312
    %2314 = vrot.lane.b32.xlu0 %v2271, 96
    %v2315 = vpop.permute.xlu0 %2314
    %2316 = vrot.lane.b32.xlu0 %v2272, 96
    %v2317 = vpop.permute.xlu0 %2316
    %2318 = vrot.lane.b32.xlu0 %v2273, 96
    %v2319 = vpop.permute.xlu0 %2318
    %2320 = vrot.lane.b32.xlu0 %v126, 96
    %v2321 = vpop.permute.xlu0 %2320
    %2322 = vrot.lane.b32.xlu0 %v2274, 96
    %v2323 = vpop.permute.xlu0 %2322
    %2324 = vrot.lane.b32.xlu0 %v2275, 96
    %v2325 = vpop.permute.xlu0 %2324
    %2326 = vrot.lane.b32.xlu0 %v2276, 96
    %v2327 = vpop.permute.xlu0 %2326
    %2328 = vrot.lane.b32.xlu0 %v2277, 96
    %v2329 = vpop.permute.xlu0 %2328
    %2330 = vrot.lane.b32.xlu0 %v2278, 96
    %v2331 = vpop.permute.xlu0 %2330
    %2332 = vrot.lane.b32.xlu0 %v2279, 96
    %v2333 = vpop.permute.xlu0 %2332
    %2334 = vrot.lane.b32.xlu0 %v2280, 96
    %v2335 = vpop.permute.xlu0 %2334
    %2336 = vrot.lane.b32.xlu0 %v129, 96
    %v2337 = vpop.permute.xlu0 %2336
    %2338 = vrot.lane.b32.xlu0 %v2281, 96
    %v2339 = vpop.permute.xlu0 %2338
    %2340 = vrot.lane.b32.xlu0 %v2282, 96
    %v2341 = vpop.permute.xlu0 %2340
    %2342 = vrot.lane.b32.xlu0 %v2283, 96
    %v2343 = vpop.permute.xlu0 %2342
    %2344 = vrot.lane.b32.xlu0 %v2284, 96
    %v2345 = vpop.permute.xlu0 %2344
    %2346 = vrot.lane.b32.xlu0 %v2285, 96
    %v2347 = vpop.permute.xlu0 %2346
    %2348 = vrot.lane.b32.xlu0 %v2286, 96
    %v2349 = vpop.permute.xlu0 %2348
    %2350 = vrot.lane.b32.xlu0 %v2287, 96
    %v2351 = vpop.permute.xlu0 %2350
    %v2384 = vadd.f32 %v1848, %v2289
    %v2385 = vadd.f32 %v1861, %v2291
    %v2386 = vadd.f32 %v1874, %v2293
    %v2387 = vadd.f32 %v1887, %v2295
    %v2388 = vadd.f32 %v1900, %v2297
    %v2389 = vadd.f32 %v1913, %v2299
    %v2390 = vadd.f32 %v1926, %v2301
    %v2391 = vadd.f32 %v1939, %v2303
    %v2392 = vadd.f32 %v1952, %v2305
    %v2393 = vadd.f32 %v1965, %v2307
    %v2394 = vadd.f32 %v1978, %v2309
    %v2395 = vadd.f32 %v1991, %v2311
    %v2396 = vadd.f32 %v2004, %v2313
    %v2397 = vadd.f32 %v2017, %v2315
    %v2398 = vadd.f32 %v2030, %v2317
    %v2399 = vadd.f32 %v2043, %v2319
    %v2400 = vadd.f32 %v2056, %v2321
    %v2401 = vadd.f32 %v2069, %v2323
    %v2402 = vadd.f32 %v2082, %v2325
    %v2403 = vadd.f32 %v2095, %v2327
    %v2404 = vadd.f32 %v2108, %v2329
    %v2405 = vadd.f32 %v2121, %v2331
    %v2406 = vadd.f32 %v2134, %v2333
    %v2407 = vadd.f32 %v2147, %v2335
    %v2408 = vadd.f32 %v2160, %v2337
    %v2409 = vadd.f32 %v2173, %v2339
    %v2410 = vadd.f32 %v2186, %v2341
    %v2411 = vadd.f32 %v2199, %v2343
    %v2412 = vadd.f32 %v2212, %v2345
    %v2413 = vadd.f32 %v2225, %v2347
    %v2414 = vadd.f32 %v2238, %v2349
    %v2415 = vadd.f32 %v2251, %v2351
    %v2416 = vld [vmem:[#allocation4 + $0x8] sm:$0x1]
    %v2417 = vlaneseq
    %v2418 = vshrl.u32 %v2417, 7
    %v2419 = vsub.s32 0, %v2418
    %v2420 = vrot.slane %v2416, %v2419
    %2422 = vrot.lane.b32.xlu0 %v2420, 64
    %v2423 = vpop.permute.xlu0 %2422
    %v2425 = vadd.f32 %v2384, %v2423
    %v2426 = vadd.f32 %v2385, %v2423
    %v2427 = vadd.f32 %v2386, %v2423
    %v2428 = vadd.f32 %v2387, %v2423
    %v2429 = vadd.f32 %v2388, %v2423
    %v2430 = vadd.f32 %v2389, %v2423
    %v2431 = vadd.f32 %v2390, %v2423
    %v2432 = vadd.f32 %v2391, %v2423
    %v2433 = vadd.f32 %v2392, %v2423
    %v2434 = vadd.f32 %v2393, %v2423
    %v2435 = vadd.f32 %v2394, %v2423
    %v2436 = vadd.f32 %v2395, %v2423
    %v2437 = vadd.f32 %v2396, %v2423
    %v2438 = vadd.f32 %v2397, %v2423
    %v2439 = vadd.f32 %v2398, %v2423
    %v2440 = vadd.f32 %v2399, %v2423
    %v2441 = vadd.f32 %v2400, %v2423
    %v2442 = vadd.f32 %v2401, %v2423
    %v2443 = vadd.f32 %v2402, %v2423
    %v2444 = vadd.f32 %v2403, %v2423
    %v2445 = vadd.f32 %v2404, %v2423
    %v2446 = vadd.f32 %v2405, %v2423
    %v2447 = vadd.f32 %v2406, %v2423
    %v2448 = vadd.f32 %v2407, %v2423
    %v2449 = vadd.f32 %v2408, %v2423
    %v2450 = vadd.f32 %v2409, %v2423
    %v2451 = vadd.f32 %v2410, %v2423
    %v2452 = vadd.f32 %v2411, %v2423
    %v2453 = vadd.f32 %v2412, %v2423
    %v2454 = vadd.f32 %v2413, %v2423
    %v2455 = vadd.f32 %v2414, %v2423
    %v2456 = vadd.f32 %v2415, %v2423
    %v2457 = vsel %vm2252, 1, 0
    %v2458 = vsel %vm2253, 1, 0
    %v2459 = vsel %vm2254, 1, 0
    %v2460 = vsel %vm2255, 1, 0
    %2461 = vset.pattern.permute.xlu0 0
    %2462 = vperm.xlu0 %2461, %v2457
    %v2463 = vpop.permute.xlu0 %2462
    %2464 = vset.pattern.permute.xlu0 0
    %2465 = vperm.xlu0 %2464, %v2458
    %v2466 = vpop.permute.xlu0 %2465
    %2467 = vset.pattern.permute.xlu0 0
    %2468 = vperm.xlu0 %2467, %v2459
    %v2469 = vpop.permute.xlu0 %2468
    %2470 = vset.pattern.permute.xlu0 0
    %2471 = vperm.xlu0 %2470, %v2460
    %v2472 = vpop.permute.xlu0 %2471
    %vm2473 = vcmp.eq.s32.totalorder %v2463, 1
    %vm2474 = vcmp.eq.s32.totalorder %v2466, 1
    %vm2475 = vcmp.eq.s32.totalorder %v2469, 1
    %vm2476 = vcmp.eq.s32.totalorder %v2472, 1
    %v2509 = vrot.slane %v2426, 7
    %vm2510 = vcmask 1041409
    %v2511 = vsel %vm2510, %v2509, %v2425
    %v2512 = vrot.slane %v2427, 6
    %vm2513 = vcmask 1042434
    %v2514 = vsel %vm2513, %v2512, %v2511
    %v2515 = vrot.slane %v2428, 5
    %vm2516 = vcmask 1043459
    %v2517 = vsel %vm2516, %v2515, %v2514
    %v2518 = vrot.slane %v2429, 4
    %vm2519 = vcmask 1044484
    %v2520 = vsel %vm2519, %v2518, %v2517
    %v2521 = vrot.slane %v2430, 3
    %vm2522 = vcmask 1045509
    %v2523 = vsel %vm2522, %v2521, %v2520
    %v2524 = vrot.slane %v2431, 2
    %vm2525 = vcmask 1046534
    %v2526 = vsel %vm2525, %v2524, %v2523
    %v2527 = vrot.slane %v2432, 1
    %vm2528 = vcmask 1047559
    %v2529 = vsel %vm2528, %v2527, %v2526
    %v2530 = vrot.slane %v2434, 7
    %v2531 = vsel %vm2510, %v2530, %v2433
    %v2532 = vrot.slane %v2435, 6
    %v2533 = vsel %vm2513, %v2532, %v2531
    %v2534 = vrot.slane %v2436, 5
    %v2535 = vsel %vm2516, %v2534, %v2533
    %v2536 = vrot.slane %v2437, 4
    %v2537 = vsel %vm2519, %v2536, %v2535
    %v2538 = vrot.slane %v2438, 3
    %v2539 = vsel %vm2522, %v2538, %v2537
    %v2540 = vrot.slane %v2439, 2
    %v2541 = vsel %vm2525, %v2540, %v2539
    %v2542 = vrot.slane %v2440, 1
    %v2543 = vsel %vm2528, %v2542, %v2541
    %v2544 = vrot.slane %v2442, 7
    %v2545 = vsel %vm2510, %v2544, %v2441
    %v2546 = vrot.slane %v2443, 6
    %v2547 = vsel %vm2513, %v2546, %v2545
    %v2548 = vrot.slane %v2444, 5
    %v2549 = vsel %vm2516, %v2548, %v2547
    %v2550 = vrot.slane %v2445, 4
    %v2551 = vsel %vm2519, %v2550, %v2549
    %v2552 = vrot.slane %v2446, 3
    %v2553 = vsel %vm2522, %v2552, %v2551
    %v2554 = vrot.slane %v2447, 2
    %v2555 = vsel %vm2525, %v2554, %v2553
    %v2556 = vrot.slane %v2448, 1
    %v2557 = vsel %vm2528, %v2556, %v2555
    %v2558 = vrot.slane %v2450, 7
    %v2559 = vsel %vm2510, %v2558, %v2449
    %v2560 = vrot.slane %v2451, 6
    %v2561 = vsel %vm2513, %v2560, %v2559
    %v2562 = vrot.slane %v2452, 5
    %v2563 = vsel %vm2516, %v2562, %v2561
    %v2564 = vrot.slane %v2453, 4
    %v2565 = vsel %vm2519, %v2564, %v2563
    %v2566 = vrot.slane %v2454, 3
    %v2567 = vsel %vm2522, %v2566, %v2565
    %v2568 = vrot.slane %v2455, 2
    %v2569 = vsel %vm2525, %v2568, %v2567
    %v2570 = vrot.slane %v2456, 1
    %v2571 = vsel %vm2528, %v2570, %v2569
    %2572 = vrot.lane.b32.xlu0 %v2529, 64
    %v2573 = vpop.permute.xlu0 %2572
    %2574 = vrot.lane.b32.xlu0 %v2543, 64
    %v2575 = vpop.permute.xlu0 %2574
    %2576 = vrot.lane.b32.xlu0 %v2557, 64
    %v2577 = vpop.permute.xlu0 %2576
    %2578 = vrot.lane.b32.xlu0 %v2571, 64
    %v2579 = vpop.permute.xlu0 %2578
    %v2584 = vsel %vm2473, %v2573, 0.0
    %v2585 = vsel %vm2474, %v2575, 0.0
    %v2586 = vsel %vm2475, %v2577, 0.0
    %v2587 = vsel %vm2476, %v2579, 0.0
    %v2588 = vpack.c.bf16 %v357, %v354
    %v2589 = vpack.c.bf16 %v365, %v362
    %v2590 = vpack.c.bf16 %v704, %v701
    %v2591 = vpack.c.bf16 %v712, %v709
    %2592 = vrot.lane.b32.xlu0 %v584, 32
    %v2593 = vpop.permute.xlu0 %2592
    %2594 = vrot.lane.b32.xlu0 %v585, 32
    %v2595 = vpop.permute.xlu0 %2594
    %v2599 = vsel %vm168, %v2590, 0
    %v2602 = vsel %vm168, %v2591, 0
    %2604 = vmatprep.subr.bf16.mxu0 0
    %2605 = vmatpush1.bf16.msra.mxu0 %v2593
    %2606 = vmatprep.subr.bf16.mxu0 0
    %2607 = vmatpush1.bf16.msra.mxu0 %v2595
    %2608 = vmatprep.subr.bf16.mxu0 0
    %2609 = vmatpush1.bf16.msra.mxu0 0
    %2610 = vmatprep.subr.bf16.mxu0 0
    %2611 = vmatpush1.bf16.msra.mxu0 0
    %2612 = vmatprep.subr.bf16.mxu0 0
    %2613 = vmatpush1.bf16.msra.mxu0 0
    %2614 = vmatprep.subr.bf16.mxu0 0
    %2615 = vmatpush1.bf16.msra.mxu0 0
    %2616 = vmatprep.subr.bf16.mxu0 0
    %2617 = vmatpush1.bf16.msra.mxu0 0
    %2618 = vmatprep.subr.bf16.mxu0 0
    %2619 = vmatpush1.bf16.msra.mxu0 0
    %2620 = vmatprep.subr.bf16.mxu0 0
    %2621 = vmatpush1.bf16.msra.mxu0 0
    %2622 = vmatprep.subr.bf16.mxu0 0
    %2623 = vmatpush1.bf16.msra.mxu0 0
    %2624 = vmatprep.subr.bf16.mxu0 0
    %2625 = vmatpush1.bf16.msra.mxu0 0
    %2626 = vmatprep.subr.bf16.mxu0 0
    %2627 = vmatpush1.bf16.msra.mxu0 0
    %2628 = vmatprep.subr.bf16.mxu0 0
    %2629 = vmatpush1.bf16.msra.mxu0 0
    %2630 = vmatprep.subr.bf16.mxu0 0
    %2631 = vmatpush1.bf16.msra.mxu0 0
    %2632 = vmatprep.subr.bf16.mxu0 0
    %2633 = vmatpush1.bf16.msra.mxu0 0
    %2634 = vmatprep.subr.bf16.mxu0 0
    %2635 = vmatpush1.bf16.msra.mxu0 0
    %2636 = vmatprep.mubr.bf16.mxu0 0
    %2637 = vmatmul.mubr.bf16.gmra.mrb[0].mxu0 %v2599
    %v2638 = vpop.f32.mrb[0].mxu0
    %v2639 = vadd.f32 0.0, %v2638
    %v2640 = vpop.f32.mrb[0].mxu0
    %v2641 = vpop.f32.mrb[0].mxu0
    %v2642 = vadd.f32 0.0, %v2641
    %v2643 = vpop.f32.mrb[0].mxu0
    %2644 = vmatprep.mubr.bf16.mxu0 0
    %2645 = vmatmul.mubr.bf16.gmra.mrb[0].mxu0 %v2602
    %v2646 = vpop.f32.mrb[0].mxu0
    %v2647 = vadd.f32 0.0, %v2646
    %v2648 = vpop.f32.mrb[0].mxu0
    %v2649 = vpop.f32.mrb[0].mxu0
    %v2650 = vadd.f32 0.0, %v2649
    %v2651 = vpop.f32.mrb[0].mxu0
    %2652 = vdwg.mxu0
    %2653 = vrot.lane.b32.xlu0 %v584, 64
    %v2654 = vpop.permute.xlu0 %2653
    %2655 = vrot.lane.b32.xlu0 %v585, 64
    %v2656 = vpop.permute.xlu0 %2655
    %v2660 = vsel %vm168, %v2588, 0
    %v2663 = vsel %vm168, %v2589, 0
    %2665 = vmatprep.subr.bf16.mxu0 0
    %2666 = vmatpush1.bf16.msra.mxu0 %v2654
    %2667 = vmatprep.subr.bf16.mxu0 0
    %2668 = vmatpush1.bf16.msra.mxu0 %v2656
    %2669 = vmatprep.subr.bf16.mxu0 0
    %2670 = vmatpush1.bf16.msra.mxu0 0
    %2671 = vmatprep.subr.bf16.mxu0 0
    %2672 = vmatpush1.bf16.msra.mxu0 0
    %2673 = vmatprep.subr.bf16.mxu0 0
    %2674 = vmatpush1.bf16.msra.mxu0 0
    %2675 = vmatprep.subr.bf16.mxu0 0
    %2676 = vmatpush1.bf16.msra.mxu0 0
    %2677 = vmatprep.subr.bf16.mxu0 0
    %2678 = vmatpush1.bf16.msra.mxu0 0
    %2679 = vmatprep.subr.bf16.mxu0 0
    %2680 = vmatpush1.bf16.msra.mxu0 0
    %2681 = vmatprep.subr.bf16.mxu0 0
    %2682 = vmatpush1.bf16.msra.mxu0 0
    %2683 = vmatprep.subr.bf16.mxu0 0
    %2684 = vmatpush1.bf16.msra.mxu0 0
    %2685 = vmatprep.subr.bf16.mxu0 0
    %2686 = vmatpush1.bf16.msra.mxu0 0
    %2687 = vmatprep.subr.bf16.mxu0 0
    %2688 = vmatpush1.bf16.msra.mxu0 0
    %2689 = vmatprep.subr.bf16.mxu0 0
    %2690 = vmatpush1.bf16.msra.mxu0 0
    %2691 = vmatprep.subr.bf16.mxu0 0
    %2692 = vmatpush1.bf16.msra.mxu0 0
    %2693 = vmatprep.subr.bf16.mxu0 0
    %2694 = vmatpush1.bf16.msra.mxu0 0
    %2695 = vmatprep.subr.bf16.mxu0 0
    %2696 = vmatpush1.bf16.msra.mxu0 0
    %2697 = vmatprep.mubr.bf16.mxu0 0
    %2698 = vmatmul.mubr.bf16.gmra.mrb[0].mxu0 %v2660
    %v2699 = vpop.f32.mrb[0].mxu0
    %v2700 = vadd.f32 %v2639, %v2699
    %v2701 = vpop.f32.mrb[0].mxu0
    %v2702 = vpop.f32.mrb[0].mxu0
    %v2703 = vadd.f32 %v2642, %v2702
    %v2704 = vpop.f32.mrb[0].mxu0
    %2705 = vmatprep.mubr.bf16.mxu0 0
    %2706 = vmatmul.mubr.bf16.gmra.mrb[0].mxu0 %v2663
    %v2707 = vpop.f32.mrb[0].mxu0
    %v2708 = vadd.f32 %v2647, %v2707
    %v2709 = vpop.f32.mrb[0].mxu0
    %v2710 = vpop.f32.mrb[0].mxu0
    %v2711 = vadd.f32 %v2650, %v2710
    %v2712 = vpop.f32.mrb[0].mxu0
    %2713 = vdwg.mxu0
    %v2714 = vld [vmem:[#allocation4 + $0x9] sm:$0x1]
    %v2715 = vlaneseq
    %v2716 = vshrl.u32 %v2715, 7
    %v2717 = vsub.s32 0, %v2716
    %v2718 = vrot.slane %v2714, %v2717
    %v2719 = vadd.f32 %v2700, %v2718
    %v2720 = vadd.f32 %v2703, %v2718
    %v2721 = vadd.f32 %v2708, %v2718
    %v2722 = vadd.f32 %v2711, %v2718
    %v2723 = vld [vmem:[%s4 + $0x20] sm:$0xf]
    %v2724 = vld [vmem:[%s4 + $0x24] sm:$0xf]
    %v2725 = vld [vmem:[%s4 + $0x28] sm:$0xf]
    %v2726 = vld [vmem:[%s4 + $0x2c] sm:$0xf]
    %v2727 = vpack.c.bf16 %v2720, %v2719
    %v2728 = vpack.c.bf16 %v2722, %v2721
    %v2729 = vld [vmem:[#allocation4 + $0xa] sm:$0x1]
    %v2730 = vlaneseq
    %v2731 = vshrl.u32 %v2730, 7
    %v2732 = vsub.s32 0, %v2731
    %v2733 = vrot.slane %v2729, %v2732
    %v2738 = vunpack.c.l.b16 %v2723
    %v2739 = vunpack.c.l.b16 %v2724
    %v2740 = vunpack.c.l.b16 %v2725
    %v2741 = vunpack.c.l.b16 %v2726
    %v2742 = vpack.c.b16 %v2739, %v2738
    %v2743 = vpack.c.b16 %v2741, %v2740
    %v2747 = vsel %vm168, %v2727, 0
    %v2750 = vsel %vm168, %v2728, 0
    %2752 = vmatprep.subr.bf16.mxu0 0
    %2753 = vmatpush1.bf16.msra.mxu0 %v2742
    %2754 = vmatprep.subr.bf16.mxu0 0
    %2755 = vmatpush1.bf16.msra.mxu0 %v2743
    %2756 = vmatprep.subr.bf16.mxu0 0
    %2757 = vmatpush1.bf16.msra.mxu0 0
    %2758 = vmatprep.subr.bf16.mxu0 0
    %2759 = vmatpush1.bf16.msra.mxu0 0
    %2760 = vmatprep.subr.bf16.mxu0 0
    %2761 = vmatpush1.bf16.msra.mxu0 0
    %2762 = vmatprep.subr.bf16.mxu0 0
    %2763 = vmatpush1.bf16.msra.mxu0 0
    %2764 = vmatprep.subr.bf16.mxu0 0
    %2765 = vmatpush1.bf16.msra.mxu0 0
    %2766 = vmatprep.subr.bf16.mxu0 0
    %2767 = vmatpush1.bf16.msra.mxu0 0
    %2768 = vmatprep.subr.bf16.mxu0 0
    %2769 = vmatpush1.bf16.msra.mxu0 0
    %2770 = vmatprep.subr.bf16.mxu0 0
    %2771 = vmatpush1.bf16.msra.mxu0 0
    %2772 = vmatprep.subr.bf16.mxu0 0
    %2773 = vmatpush1.bf16.msra.mxu0 0
    %2774 = vmatprep.subr.bf16.mxu0 0
    %2775 = vmatpush1.bf16.msra.mxu0 0
    %2776 = vmatprep.subr.bf16.mxu0 0
    %2777 = vmatpush1.bf16.msra.mxu0 0
    %2778 = vmatprep.subr.bf16.mxu0 0
    %2779 = vmatpush1.bf16.msra.mxu0 0
    %2780 = vmatprep.subr.bf16.mxu0 0
    %2781 = vmatpush1.bf16.msra.mxu0 0
    %2782 = vmatprep.subr.bf16.mxu0 0
    %2783 = vmatpush1.bf16.msra.mxu0 0
    %2784 = vmatprep.mubr.bf16.mxu0 0
    %2785 = vmatmul.mubr.bf16.gmra.mrb[0].mxu0 %v2747
    %v2786 = vpop.f32.mrb[0].mxu0
    %v2787 = vadd.f32 %v2733, %v2786
    %v2788 = vpop.f32.mrb[0].mxu0
    %v2789 = vpop.f32.mrb[0].mxu0
    %v2790 = vadd.f32 %v2733, %v2789
    %v2791 = vpop.f32.mrb[0].mxu0
    %2792 = vmatprep.mubr.bf16.mxu0 0
    %2793 = vmatmul.mubr.bf16.gmra.mrb[0].mxu0 %v2750
    %v2794 = vpop.f32.mrb[0].mxu0
    %v2795 = vadd.f32 %v2733, %v2794
    %v2796 = vpop.f32.mrb[0].mxu0
    %v2797 = vpop.f32.mrb[0].mxu0
    %v2798 = vadd.f32 %v2733, %v2797
    %v2799 = vpop.f32.mrb[0].mxu0
    %2800 = vdwg.mxu0
    %v2801 = vxor.u32 %v2787, 2147483648
    %v2802 = vxor.u32 %v2790, 2147483648
    %v2803 = vxor.u32 %v2795, 2147483648
    %v2804 = vxor.u32 %v2798, 2147483648
    %v2805 = vmul.f32 %v2801, 1.442695
    %v2806 = vpow.pop %v2805
    %v2807 = vmul.f32 %v2802, 1.442695
    %v2808 = vpow.pop %v2807
    %v2809 = vmul.f32 %v2803, 1.442695
    %v2810 = vpow.pop %v2809
    %v2811 = vmul.f32 %v2804, 1.442695
    %v2812 = vpow.pop %v2811
    %v2813 = vadd.f32 %v2806, 1.0
    %v2814 = vadd.f32 %v2808, 1.0
    %v2815 = vadd.f32 %v2810, 1.0
    %v2816 = vadd.f32 %v2812, 1.0
    %v2817 = vrcp.pop %v2813
    %v2818 = vmul.f32 1.0, %v2817
    %v2819 = vrcp.pop %v2814
    %v2820 = vmul.f32 1.0, %v2819
    %v2821 = vrcp.pop %v2815
    %v2822 = vmul.f32 1.0, %v2821
    %v2823 = vrcp.pop %v2816
    %v2824 = vmul.f32 1.0, %v2823
    %v2825 = vmul.f32 %v2818, %v2719
    %v2826 = vmul.f32 %v2820, %v2720
    %v2827 = vmul.f32 %v2822, %v2721
    %v2828 = vmul.f32 %v2824, %v2722
    %v2829 = vsub.f32 1.0, %v2818
    %v2830 = vsub.f32 1.0, %v2820
    %v2831 = vsub.f32 1.0, %v2822
    %v2832 = vsub.f32 1.0, %v2824
    %v2833 = vmul.f32 %v2829, %v2584
    %v2834 = vmul.f32 %v2830, %v2585
    %v2835 = vmul.f32 %v2831, %v2586
    %v2836 = vmul.f32 %v2832, %v2587
    %v2837 = vadd.f32 %v2825, %v2833
    %v2838 = vadd.f32 %v2826, %v2834
    %v2839 = vadd.f32 %v2827, %v2835
    %v2840 = vadd.f32 %v2828, %v2836
    %v2841 = vpack.c.bf16 %v2838, %v2837
    %v2842 = vpack.c.bf16 %v2840, %v2839
    %v2843 = vld [vmem:[#allocation4 + $0xb] sm:$0x1]
    %v2844 = vlaneseq
    %v2845 = vshrl.u32 %v2844, 7
    %v2846 = vsub.s32 0, %v2845
    %v2847 = vrot.slane %v2843, %v2846
    %2848 = vrot.lane.b32.xlu0 %v2742, 96
    %v2849 = vpop.permute.xlu0 %2848
    %2850 = vrot.lane.b32.xlu0 %v2743, 96
    %v2851 = vpop.permute.xlu0 %2850
    %v2855 = vsel %vm168, %v2841, 0
    %v2858 = vsel %vm168, %v2842, 0
    %2860 = vmatprep.subr.bf16.mxu0 0
    %2861 = vmatpush1.bf16.msra.mxu0 %v2849
    %2862 = vmatprep.subr.bf16.mxu0 0
    %2863 = vmatpush1.bf16.msra.mxu0 %v2851
    %2864 = vmatprep.subr.bf16.mxu0 0
    %2865 = vmatpush1.bf16.msra.mxu0 0
    %2866 = vmatprep.subr.bf16.mxu0 0
    %2867 = vmatpush1.bf16.msra.mxu0 0
    %2868 = vmatprep.subr.bf16.mxu0 0
    %2869 = vmatpush1.bf16.msra.mxu0 0
    %2870 = vmatprep.subr.bf16.mxu0 0
    %2871 = vmatpush1.bf16.msra.mxu0 0
    %2872 = vmatprep.subr.bf16.mxu0 0
    %2873 = vmatpush1.bf16.msra.mxu0 0
    %2874 = vmatprep.subr.bf16.mxu0 0
    %2875 = vmatpush1.bf16.msra.mxu0 0
    %2876 = vmatprep.subr.bf16.mxu0 0
    %2877 = vmatpush1.bf16.msra.mxu0 0
    %2878 = vmatprep.subr.bf16.mxu0 0
    %2879 = vmatpush1.bf16.msra.mxu0 0
    %2880 = vmatprep.subr.bf16.mxu0 0
    %2881 = vmatpush1.bf16.msra.mxu0 0
    %2882 = vmatprep.subr.bf16.mxu0 0
    %2883 = vmatpush1.bf16.msra.mxu0 0
    %2884 = vmatprep.subr.bf16.mxu0 0
    %2885 = vmatpush1.bf16.msra.mxu0 0
    %2886 = vmatprep.subr.bf16.mxu0 0
    %2887 = vmatpush1.bf16.msra.mxu0 0
    %2888 = vmatprep.subr.bf16.mxu0 0
    %2889 = vmatpush1.bf16.msra.mxu0 0
    %2890 = vmatprep.subr.bf16.mxu0 0
    %2891 = vmatpush1.bf16.msra.mxu0 0
    %2892 = vmatprep.mubr.bf16.mxu0 0
    %2893 = vmatmul.mubr.bf16.gmra.mrb[0].mxu0 %v2855
    %v2894 = vpop.f32.mrb[0].mxu0
    %v2895 = vadd.f32 %v2847, %v2894
    %v2896 = vpop.f32.mrb[0].mxu0
    %v2897 = vpop.f32.mrb[0].mxu0
    %v2898 = vadd.f32 %v2847, %v2897
    %v2899 = vpop.f32.mrb[0].mxu0
    %2900 = vmatprep.mubr.bf16.mxu0 0
    %2901 = vmatmul.mubr.bf16.gmra.mrb[0].mxu0 %v2858
    %v2902 = vpop.f32.mrb[0].mxu0
    %v2903 = vadd.f32 %v2847, %v2902
    %v2904 = vpop.f32.mrb[0].mxu0
    %v2905 = vpop.f32.mrb[0].mxu0
    %v2906 = vadd.f32 %v2847, %v2905
    %v2907 = vpop.f32.mrb[0].mxu0
    %2908 = vdwg.mxu0
    %v2909 = vtanh.pop %v2895
    %v2910 = vtanh.pop %v2898
    %v2911 = vtanh.pop %v2903
    %v2912 = vtanh.pop %v2906
    %v2913 = vld [vmem:[%s4 + $0x30] sm:$0xf]
    %v2914 = vld [vmem:[%s4 + $0x34] sm:$0xf]
    %v2915 = vld [vmem:[%s4 + $0x38] sm:$0xf]
    %v2916 = vld [vmem:[%s4 + $0x3c] sm:$0xf]
    %v2917 = vpack.c.bf16 %v2910, %v2909
    %v2918 = vpack.c.bf16 %v2912, %v2911
    %v2919 = vld [vmem:[#allocation4 + $0xc] sm:$0x1]
    %v2920 = vlaneseq
    %v2921 = vshrl.u32 %v2920, 7
    %v2922 = vsub.s32 0, %v2921
    %v2923 = vrot.slane %v2919, %v2922
    %v2928 = vunpack.c.l.b16 %v2913
    %v2929 = vunpack.c.l.b16 %v2914
    %v2930 = vunpack.c.l.b16 %v2915
    %v2931 = vunpack.c.l.b16 %v2916
    %v2932 = vpack.c.b16 %v2929, %v2928
    %v2933 = vpack.c.b16 %v2931, %v2930
    %v2937 = vsel %vm168, %v2917, 0
    %v2940 = vsel %vm168, %v2918, 0
    %2942 = vmatprep.subr.bf16.mxu0 0
    %2943 = vmatpush1.bf16.msra.mxu0 %v2932
    %2944 = vmatprep.subr.bf16.mxu0 0
    %2945 = vmatpush1.bf16.msra.mxu0 %v2933
    %2946 = vmatprep.subr.bf16.mxu0 0
    %2947 = vmatpush1.bf16.msra.mxu0 0
    %2948 = vmatprep.subr.bf16.mxu0 0
    %2949 = vmatpush1.bf16.msra.mxu0 0
    %2950 = vmatprep.subr.bf16.mxu0 0
    %2951 = vmatpush1.bf16.msra.mxu0 0
    %2952 = vmatprep.subr.bf16.mxu0 0
    %2953 = vmatpush1.bf16.msra.mxu0 0
    %2954 = vmatprep.subr.bf16.mxu0 0
    %2955 = vmatpush1.bf16.msra.mxu0 0
    %2956 = vmatprep.subr.bf16.mxu0 0
    %2957 = vmatpush1.bf16.msra.mxu0 0
    %2958 = vmatprep.subr.bf16.mxu0 0
    %2959 = vmatpush1.bf16.msra.mxu0 0
    %2960 = vmatprep.subr.bf16.mxu0 0
    %2961 = vmatpush1.bf16.msra.mxu0 0
    %2962 = vmatprep.subr.bf16.mxu0 0
    %2963 = vmatpush1.bf16.msra.mxu0 0
    %2964 = vmatprep.subr.bf16.mxu0 0
    %2965 = vmatpush1.bf16.msra.mxu0 0
    %2966 = vmatprep.subr.bf16.mxu0 0
    %2967 = vmatpush1.bf16.msra.mxu0 0
    %2968 = vmatprep.subr.bf16.mxu0 0
    %2969 = vmatpush1.bf16.msra.mxu0 0
    %2970 = vmatprep.subr.bf16.mxu0 0
    %2971 = vmatpush1.bf16.msra.mxu0 0
    %2972 = vmatprep.subr.bf16.mxu0 0
    %2973 = vmatpush1.bf16.msra.mxu0 0
    %2974 = vmatprep.mubr.bf16.mxu0 0
    %2975 = vmatmul.mubr.bf16.gmra.mrb[0].mxu0 %v2937
    %v2976 = vpop.f32.mrb[0].mxu0
    %v2977 = vadd.f32 %v2923, %v2976
    %v2978 = vpop.f32.mrb[0].mxu0
    %v2979 = vpop.f32.mrb[0].mxu0
    %v2980 = vadd.f32 %v2923, %v2979
    %v2981 = vpop.f32.mrb[0].mxu0
    %2982 = vmatprep.mubr.bf16.mxu0 0
    %2983 = vmatmul.mubr.bf16.gmra.mrb[0].mxu0 %v2940
    %v2984 = vpop.f32.mrb[0].mxu0
    %v2985 = vadd.f32 %v2923, %v2984
    %v2986 = vpop.f32.mrb[0].mxu0
    %v2987 = vpop.f32.mrb[0].mxu0
    %v2988 = vadd.f32 %v2923, %v2987
    %v2989 = vpop.f32.mrb[0].mxu0
    %2990 = vdwg.mxu0
    %2991 = vst [vmem:[%s6] sm:$0xff] %v2977
    %2992 = vst [vmem:[%s6 + $0x8] sm:$0xff] %v2980
    %2993 = vst [vmem:[%s6 + $0x10] sm:$0xff] %v2985
    %2994 = vst [vmem:[%s6 + $0x18] sm:$0xff] %v2988
    // Predicated region
    $region34: #{mgadn_forward.1} parent=1 // pred_check
      _
    $region35: #{mgadn_forward.1} parent=1 // pred_check_branch
      %2996 = sbr.rel (0) target = $region37
    $region36: #{mgadn_forward.1} parent=1 // pred_region
      _
    $region37: #{mgadn_forward.1} parent=1 // pred_fallthru
      _
    // Predicated region
    $region38: #{mgadn_forward.1} parent=1 // pred_check
      _
    $region39: #{mgadn_forward.1} parent=1 // pred_check_branch
      %2998 = sbr.rel (0) target = $region41
    $region40: #{mgadn_forward.1} parent=1 // pred_region
      _
    $region41: #{mgadn_forward.1} parent=1 // pred_fallthru
      _
    %2999 = vsyncpa [#allocation3], 1
    %3000 = vsyncpa [#allocation5], 1

</llo_original>
